<compile_context>
chip_gen: v7x
topology: tpu7x:2x2x1
jax: 0.10.0
libtpu: 0.0.40
codegen_flags: <defaults>
</compile_context>

<pallas_src>
import numpy as np
import jax
import jax.numpy as jnp
from jax.experimental import pallas as pl
from jax.experimental.pallas import tpu as pltpu

D = 8          # number of spatial-aware heads (d=8 in SpatialAware)
PATCH = 16     # backbone patch size (x.shape // 16 in SAFABranch.forward)


# --------------------------------------------------------------------------- #
# Wrapper-side layout helpers
# --------------------------------------------------------------------------- #
def patchify(x):
    """(B, Cin, Hp*16, Wp*16) -> (B, Hp*Wp, Cin*16*16), row-major over the HxW grid."""
    B, Cin, Hi, Wi = x.shape
    Hp, Wp = Hi // PATCH, Wi // PATCH
    x = x.reshape(B, Cin, Hp, PATCH, Wp, PATCH)
    x = jnp.transpose(x, (0, 2, 4, 1, 3, 5))               # (B, Hp, Wp, Cin, 16, 16)
    return x.reshape(B, Hp * Wp, Cin * PATCH * PATCH)


def pooled_patchify(x):
    """Patchify + 2x2/stride-2 average pooling over the token grid, fused.

    Exact w.r.t. pool-after-embed because the patch embed is linear:
        mean(tokens of a 2x2 block) == mean(patches of the block) @ W + b.
    Returns (B, L, P) with L = (Hp//2)*(Wp//2), P = Cin*16*16.
    """
    B, Cin, Hi, Wi = x.shape
    Hp, Wp = Hi // PATCH, Wi // PATCH
    H2, W2 = Hp // 2, Wp // 2
    x = x.reshape(B, Cin, H2, 2, PATCH, W2, 2, PATCH)
    # -> (B, i2, j2, di, dj, Cin, ph, pw)
    x = jnp.transpose(x, (0, 2, 5, 3, 6, 1, 4, 7))
    x = x.mean(axis=(3, 4))                                 # (B, H2, W2, Cin, 16, 16)
    return x.reshape(B, H2 * W2, Cin * PATCH * PATCH)


# --------------------------------------------------------------------------- #
# Pallas kernel: one grid step processes Bblk batch elements
# --------------------------------------------------------------------------- #
def _safa_kernel(pp_ref, we_ref, be_ref, w1_ref, b1_ref, w2_ref, b2_ref, out_ref):
    Bblk, L, P = pp_ref.shape
    C = we_ref.shape[1]

    # (1) Patch embed of the pre-pooled patches. Batch is folded into M so the
    #     MXU sees one (Bblk*L, P) @ (P, C) bf16 matmul with f32 accumulation.
    pp = pp_ref[...].reshape(Bblk * L, P)                               # bf16
    featT = jnp.dot(pp, we_ref[...],
                    preferred_element_type=jnp.float32) + be_ref[...]   # (Bblk*L, C) f32
    featT3 = featT.reshape(Bblk, L, C)                                  # (Bblk, L, C)

    # (2) Channel mean taken directly on the (L, C) layout (lane reduce,
    #     no (C, L) transpose needed).
    x_mean = jnp.mean(featT3, axis=-1)                                  # (Bblk, L) f32

    # (3) Fused 8-head MLP: concatenated W1 and block-diagonal W2 turn the
    #     per-head loop into two lane-dense matmuls.
    h1 = jnp.dot(x_mean, w1_ref[...],
                 preferred_element_type=jnp.float32) + b1_ref[...]      # (Bblk, D*Lh)
    h2 = jnp.dot(h1, w2_ref[...],
                 preferred_element_type=jnp.float32) + b2_ref[...]      # (Bblk, D*L)
    h2 = h2.reshape(Bblk, D, L)

    # (4) out[b, h, c] = sum_l h2[b, h, l] * featT[b, l, c]
    out = jnp.einsum("bdl,blc->bdc", h2, featT3,
                     preferred_element_type=jnp.float32)                # (Bblk, D, C)

    # Lane-dense store: last dim D*C (multiple of 128 at these shapes).
    out_ref[...] = out.reshape(Bblk, 1, D * C)


# --------------------------------------------------------------------------- #
# Host wrapper
# --------------------------------------------------------------------------- #
def safa_branch_forward(x, params):
    """x: (B, Cin, Himg, Wimg) NCHW.  Returns (B, 8*C)."""
    B = x.shape[0]
    pooled = pooled_patchify(x).astype(jnp.float32)         # (B, L, P)
    _, L, P = pooled.shape
    C = params["w_embed"].shape[1]
    Lh = params["w1"].shape[-1]
    DC = D * C

    # bf16 for the big DMA + big matmul; biases / small MLP weights stay f32.
    pooled_bf = pooled.astype(jnp.bfloat16)
    we_bf = params["w_embed"].astype(jnp.bfloat16)

    # Fuse the 8 heads: concat W1 along columns, block-diagonal W2.
    w1_cat = jnp.concatenate([params["w1"][h] for h in range(D)], axis=1)    # (L, D*Lh)
    b1_cat = jnp.concatenate([params["b1"][h] for h in range(D)], axis=1)    # (1, D*Lh)
    w2_bd = jnp.zeros((D * Lh, D * L), jnp.float32)
    for h in range(D):
        w2_bd = w2_bd.at[h * Lh:(h + 1) * Lh, h * L:(h + 1) * L].set(params["w2"][h])
    b2_cat = jnp.concatenate([params["b2"][h] for h in range(D)], axis=1)    # (1, D*L)

    # Batch blocking: fold up to 8 images into one grid step, but keep >= 2
    # grid steps when B >= 2 so both v7x TensorCores get work.
    Bblk = min(B, 8)
    if B >= 2 and pl.cdiv(B, Bblk) < 2:
        Bblk = pl.cdiv(B, 2)
    steps = pl.cdiv(B, Bblk)
    Bpad = steps * Bblk
    if Bpad != B:
        pooled_bf = jnp.pad(pooled_bf, ((0, Bpad - B), (0, 0), (0, 0)))

    out = pl.pallas_call(
        _safa_kernel,
        out_shape=jax.ShapeDtypeStruct((Bpad, 1, DC), jnp.float32),
        grid_spec=pltpu.PrefetchScalarGridSpec(
            num_scalar_prefetch=0,
            grid=(steps,),
            in_specs=[
                pl.BlockSpec((Bblk, L, P), lambda b: (b, 0, 0)),       # pooled patches (bf16)
                # Constant index_maps below keep the weights VMEM-resident
                # across the sequential grid (no per-step re-DMA).
                pl.BlockSpec((P, C), lambda b: (0, 0)),                # w_embed (bf16)
                pl.BlockSpec((1, C), lambda b: (0, 0)),                # b_embed
                pl.BlockSpec((L, D * Lh), lambda b: (0, 0)),           # W1 (concat)
                pl.BlockSpec((1, D * Lh), lambda b: (0, 0)),           # b1 (concat)
                pl.BlockSpec((D * Lh, D * L), lambda b: (0, 0)),       # W2 (block-diag)
                pl.BlockSpec((1, D * L), lambda b: (0, 0)),            # b2 (concat)
            ],
            out_specs=pl.BlockSpec((Bblk, 1, DC), lambda b: (b, 0, 0)),
        ),
        compiler_params=pltpu.CompilerParams(
            dimension_semantics=("parallel",)),
        # TODO(synk): set vmem_limit_bytes explicitly when scaling to ViT-scale
        # shapes on v7x (64 MiB physical VMEM / 32 MiB scoped default).
    )(pooled_bf, we_bf, params["b_embed"], w1_cat, b1_cat, w2_bd, b2_cat)

    # (Bpad, 1, D*C) -> (B, D*C); matches torch's transpose(-1,-2).flatten(-2,-1)
    return out.reshape(Bpad, DC)[:B]


# --------------------------------------------------------------------------- #
# Pure-JAX f32 reference that mirrors the PyTorch module exactly
# --------------------------------------------------------------------------- #
def reference_forward(x, params):
    B, _, Hi, Wi = x.shape
    H, W = Hi // PATCH, Wi // PATCH
    patches = patchify(x).astype(jnp.float32)
    tokens = patches @ params["w_embed"] + params["b_embed"]      # (B, N, C)
    C = tokens.shape[-1]
    feat = jnp.transpose(tokens, (0, 2, 1)).reshape(B, C, H, W)   # NCHW feature map
    pooled = feat.reshape(B, C, H // 2, 2, W // 2, 2).mean(axis=(3, 5))
    xf = pooled.reshape(B, C, -1)                                 # (B, C, L)
    xm = xf.mean(axis=1)                                          # (B, L)
    heads = []
    for h in range(D):
        h1 = xm @ params["w1"][h] + params["b1"][h][0]
        h2 = h1 @ params["w2"][h] + params["b2"][h][0]
        heads.append(h2)
    x_sa = jnp.stack(heads, axis=-1)                              # (B, L, 8)
    out = xf @ x_sa                                               # (B, C, 8)
    return jnp.transpose(out, (0, 2, 1)).reshape(B, -1)           # (B, 8*C)


def make_params(key, Cin, Hi, Wi, C):
    Hp, Wp = Hi // PATCH, Wi // PATCH
    P = Cin * PATCH * PATCH
    L = (Hp // 2) * (Wp // 2)
    Lh = L // 2

    ks = jax.random.split(key, 6)
    return {
        # backbone: patch-embed Linear (== Conv2d(Cin, C, 16, 16) + flatten)
        "w_embed": jax.random.normal(ks[0], (P, C), jnp.float32) * 0.02,
        "b_embed": jax.random.normal(ks[1], (1, C), jnp.float32) * 0.02,
        # SpatialAware: 8 x [Linear(L, L//2), Linear(L//2, L)], stored as x @ W
        "w1": jax.random.normal(ks[2], (D, L, Lh), jnp.float32) / np.sqrt(L),
        "b1": jax.random.normal(ks[3], (D, 1, Lh), jnp.float32) * 0.1,
        "w2": jax.random.normal(ks[4], (D, Lh, L), jnp.float32) / np.sqrt(Lh),
        "b2": jax.random.normal(ks[5], (D, 1, L), jnp.float32) * 0.1,
    }


if __name__ == "__main__":
    # B=4, Cin=4, 128x128 image -> token grid 8x8 (N=64), pooled grid 4x4 (L=16),
    # embed dim C=32, so D*C = 256 (lane-dense output).  Bblk=2, grid=(2,).
    B, Cin, Hi, Wi, C = 4, 4, 128, 128, 32

    key = jax.random.PRNGKey(0)
    kx, kp = jax.random.split(key)
    x = jax.random.normal(kx, (B, Cin, Hi, Wi), jnp.float32)
    params = make_params(kp, Cin, Hi, Wi, C)

    out = jax.block_until_ready(safa_branch_forward(x, params))
    ref = jax.block_until_ready(reference_forward(x, params))

    assert out.shape == (B, D * C), out.shape
    # bf16 embed inputs with f32 accumulation vs. the pure-f32 reference.
    np.testing.assert_allclose(np.asarray(out), np.asarray(ref), rtol=2e-2, atol=2e-2)
    print("KERNEL_OK")
</pallas_src>

<mosaic_0001>
module attributes {stable_mosaic.version = 11 : i64} {
  func.func @_safa_kernel(%arg0: i32, %arg1: memref<2x16x1024xbf16, #tpu.memory_space<vmem>>, %arg2: memref<1024x32xbf16, #tpu.memory_space<vmem>>, %arg3: memref<1x32xf32, #tpu.memory_space<vmem>>, %arg4: memref<16x64xf32, #tpu.memory_space<vmem>>, %arg5: memref<1x64xf32, #tpu.memory_space<vmem>>, %arg6: memref<64x128xf32, #tpu.memory_space<vmem>>, %arg7: memref<1x128xf32, #tpu.memory_space<vmem>>, %arg8: memref<2x1x256xf32, #tpu.memory_space<vmem>>) attributes {dimension_semantics = [#tpu.dimension_semantics<parallel>], iteration_bounds = array<i64: 2>, scalar_prefetch = 0 : i64, scratch_operands = 0 : i64, tpu.core_type = #tpu.core_type<tc>, window_params = [{transform_indices = @transform_0, window_bounds = array<i64: 2, 16, 1024>}, {pipeline_mode = #tpu.pipeline_mode<synchronous>, transform_indices = @transform_1, window_bounds = array<i64: 1024, 32>}, {pipeline_mode = #tpu.pipeline_mode<synchronous>, transform_indices = @transform_2, window_bounds = array<i64: 1, 32>}, {pipeline_mode = #tpu.pipeline_mode<synchronous>, transform_indices = @transform_3, window_bounds = array<i64: 16, 64>}, {pipeline_mode = #tpu.pipeline_mode<synchronous>, transform_indices = @transform_4, window_bounds = array<i64: 1, 64>}, {pipeline_mode = #tpu.pipeline_mode<synchronous>, transform_indices = @transform_5, window_bounds = array<i64: 64, 128>}, {pipeline_mode = #tpu.pipeline_mode<synchronous>, transform_indices = @transform_6, window_bounds = array<i64: 1, 128>}, {transform_indices = @transform_7, window_bounds = array<i64: 2, 1, 256>}]} {
    %c0 = arith.constant 0 : index
    %c0_0 = arith.constant 0 : index
    %c0_1 = arith.constant 0 : index
    %0 = vector.load %arg1[%c0, %c0_0, %c0_1] : memref<2x16x1024xbf16, #tpu.memory_space<vmem>>, vector<2x16x1024xbf16>
    %1 = vector.shape_cast %0 : vector<2x16x1024xbf16> to vector<32x1024xbf16>
    %c0_2 = arith.constant 0 : index
    %c0_3 = arith.constant 0 : index
    %2 = vector.load %arg2[%c0_2, %c0_3] : memref<1024x32xbf16, #tpu.memory_space<vmem>>, vector<1024x32xbf16>
    %cst = arith.constant dense<0.000000e+00> : vector<32x32xf32>
    %3 = tpu.matmul %1, %2, %cst {dimension_numbers = #tpu.dot_dimension_numbers<[1], [0], [0], [1], [0, 0, 1, 1], [], []>} : vector<32x1024xbf16>, vector<1024x32xbf16>, vector<32x32xf32> -> vector<32x32xf32>
    %c0_4 = arith.constant 0 : index
    %c0_5 = arith.constant 0 : index
    %4 = vector.load %arg3[%c0_4, %c0_5] : memref<1x32xf32, #tpu.memory_space<vmem>>, vector<1x32xf32>
    %5 = vector.broadcast %4 : vector<1x32xf32> to vector<32x32xf32>
    %6 = arith.addf %3, %5 : vector<32x32xf32>
    %7 = vector.shape_cast %6 : vector<32x32xf32> to vector<2x16x32xf32>
    %cst_6 = arith.constant dense<0.000000e+00> : vector<2x16xf32>
    %8 = vector.multi_reduction <add>, %7, %cst_6 [2] : vector<2x16x32xf32> to vector<2x16xf32>
    %cst_7 = arith.constant 3.200000e+01 : f32
    %9 = vector.broadcast %cst_7 : f32 to vector<2x16xf32>
    %10 = arith.divf %8, %9 : vector<2x16xf32>
    %c0_8 = arith.constant 0 : index
    %c0_9 = arith.constant 0 : index
    %11 = vector.load %arg4[%c0_8, %c0_9] : memref<16x64xf32, #tpu.memory_space<vmem>>, vector<16x64xf32>
    %cst_10 = arith.constant dense<0.000000e+00> : vector<2x64xf32>
    %12 = tpu.matmul %10, %11, %cst_10 {dimension_numbers = #tpu.dot_dimension_numbers<[1], [0], [0], [1], [0, 0, 1, 1], [], []>} : vector<2x16xf32>, vector<16x64xf32>, vector<2x64xf32> -> vector<2x64xf32>
    %c0_11 = arith.constant 0 : index
    %c0_12 = arith.constant 0 : index
    %13 = vector.load %arg5[%c0_11, %c0_12] : memref<1x64xf32, #tpu.memory_space<vmem>>, vector<1x64xf32>
    %14 = vector.broadcast %13 : vector<1x64xf32> to vector<2x64xf32>
    %15 = arith.addf %12, %14 : vector<2x64xf32>
    %c0_13 = arith.constant 0 : index
    %c0_14 = arith.constant 0 : index
    %16 = vector.load %arg6[%c0_13, %c0_14] : memref<64x128xf32, #tpu.memory_space<vmem>>, vector<64x128xf32>
    %cst_15 = arith.constant dense<0.000000e+00> : vector<2x128xf32>
    %17 = tpu.matmul %15, %16, %cst_15 {dimension_numbers = #tpu.dot_dimension_numbers<[1], [0], [0], [1], [0, 0, 1, 1], [], []>} : vector<2x64xf32>, vector<64x128xf32>, vector<2x128xf32> -> vector<2x128xf32>
    %c0_16 = arith.constant 0 : index
    %c0_17 = arith.constant 0 : index
    %18 = vector.load %arg7[%c0_16, %c0_17] : memref<1x128xf32, #tpu.memory_space<vmem>>, vector<1x128xf32>
    %19 = vector.broadcast %18 : vector<1x128xf32> to vector<2x128xf32>
    %20 = arith.addf %17, %19 : vector<2x128xf32>
    %21 = vector.shape_cast %20 : vector<2x128xf32> to vector<2x8x16xf32>
    "tpu.trace_start"() <{level = 10 : i32, message = "bdl,blc->bdc"}> : () -> ()
    %cst_18 = arith.constant dense<0.000000e+00> : vector<2x8x32xf32>
    %22 = tpu.matmul %21, %7, %cst_18 {dimension_numbers = #tpu.dot_dimension_numbers<[2], [1], [1], [2], [0, 0, 0, 1, 1, 2], [0], [0]>} : vector<2x8x16xf32>, vector<2x16x32xf32>, vector<2x8x32xf32> -> vector<2x8x32xf32>
    "tpu.trace_stop"() : () -> ()
    %23 = vector.shape_cast %22 : vector<2x8x32xf32> to vector<2x1x256xf32>
    %c0_19 = arith.constant 0 : index
    %c0_20 = arith.constant 0 : index
    %c0_21 = arith.constant 0 : index
    %24 = vector.load %arg8[%c0_19, %c0_20, %c0_21] : memref<2x1x256xf32, #tpu.memory_space<vmem>>, vector<2x1x256xf32>
    tpu.vector_store %arg8[%c0_19, %c0_20, %c0_21], %23 {strides = array<i32>} : memref<2x1x256xf32, #tpu.memory_space<vmem>>, vector<2x1x256xf32>,
    return
  }
  func.func @transform_0(%arg0: i32) -> (i32, i32, i32) {
    %c0_i32 = arith.constant 0 : i32
    %c0_i32_0 = arith.constant 0 : i32
    %c0_i32_1 = arith.constant 0 : i32
    return %arg0, %c0_i32, %c0_i32_0 : i32, i32, i32
  }
  func.func @transform_1(%arg0: i32) -> (i32, i32) {
    %c0_i32 = arith.constant 0 : i32
    %c0_i32_0 = arith.constant 0 : i32
    %c0_i32_1 = arith.constant 0 : i32
    return %c0_i32, %c0_i32_0 : i32, i32
  }
  func.func @transform_2(%arg0: i32) -> (i32, i32) {
    %c0_i32 = arith.constant 0 : i32
    %c0_i32_0 = arith.constant 0 : i32
    %c0_i32_1 = arith.constant 0 : i32
    return %c0_i32, %c0_i32_0 : i32, i32
  }
  func.func @transform_3(%arg0: i32) -> (i32, i32) {
    %c0_i32 = arith.constant 0 : i32
    %c0_i32_0 = arith.constant 0 : i32
    %c0_i32_1 = arith.constant 0 : i32
    return %c0_i32, %c0_i32_0 : i32, i32
  }
  func.func @transform_4(%arg0: i32) -> (i32, i32) {
    %c0_i32 = arith.constant 0 : i32
    %c0_i32_0 = arith.constant 0 : i32
    %c0_i32_1 = arith.constant 0 : i32
    return %c0_i32, %c0_i32_0 : i32, i32
  }
  func.func @transform_5(%arg0: i32) -> (i32, i32) {
    %c0_i32 = arith.constant 0 : i32
    %c0_i32_0 = arith.constant 0 : i32
    %c0_i32_1 = arith.constant 0 : i32
    return %c0_i32, %c0_i32_0 : i32, i32
  }
  func.func @transform_6(%arg0: i32) -> (i32, i32) {
    %c0_i32 = arith.constant 0 : i32
    %c0_i32_0 = arith.constant 0 : i32
    %c0_i32_1 = arith.constant 0 : i32
    return %c0_i32, %c0_i32_0 : i32, i32
  }
  func.func @transform_7(%arg0: i32) -> (i32, i32, i32) {
    %c0_i32 = arith.constant 0 : i32
    %c0_i32_0 = arith.constant 0 : i32
    %c0_i32_1 = arith.constant 0 : i32
    return %arg0, %c0_i32, %c0_i32_0 : i32, i32, i32
  }
}

</mosaic_0001>

<llo_original>
// kernel: tpu_custom_call.1
$region0: #{tpu_custom_call.1}
  #allocation0 [shape = 'u32[]', space=smem, size = 0x4, offset = 0x4, fixed_abs, tag = 'smem constant byte address 0x4 - core index']
  #allocation1 [shape = 'u32[144,128]{1,0:T(1,128)}', space=vmem, size = 0x12000, scoped, tag = 'internal scratch']
  %s0 = inlined_call_operand.vmem [shape: bf16[4,16,1024], index: 0, kind: input, shape index: {}]
  %s1 = inlined_call_operand.vmem [shape: bf16[1024,32], index: 1, kind: input, shape index: {}]
  %s2 = inlined_call_operand.vmem [shape: f32[1,32], index: 2, kind: input, shape index: {}]
  %s3 = inlined_call_operand.vmem [shape: f32[16,64], index: 3, kind: input, shape index: {}]
  %s4 = inlined_call_operand.vmem [shape: f32[1,64], index: 4, kind: input, shape index: {}]
  %s5 = inlined_call_operand.vmem [shape: f32[64,128], index: 5, kind: input, shape index: {}]
  %s6 = inlined_call_operand.vmem [shape: f32[1,128], index: 6, kind: input, shape index: {}]
  %s7 = inlined_call_operand.hbm [shape: f32[4,1,256], index: 7, kind: output, shape index: {}]
  %s8 = sld [smem:[#allocation0]]
  $region61: #{tpu_custom_call.1} parent=0
    _
  %s10 = ssub.s32 1, %s8
  %s11 = scalar_select 0, %s10, %s8
  $region1: #{tpu_custom_call.1} parent=0
    #allocation2 [shape = 'u8[4096]{0}', space=vmem, size = 0x1000, scoped, tag = 'output window, operand 0']
    #allocation3 [shape = 's32[2]{0}', space=sflag, size = 0x8, scoped, tag = 'scoped memory for tpu_custom_call.1']
    %12 = vsyncpa [#allocation3], 0
    %s13 = scalar_lea.sflag [#allocation3], 1
    %14 = vsyncpa %s13, 0
    loop: start=0, step=1, limit=4
    $region2: #{tpu_custom_call.1} parent=1 // loop_pre_header
      _
    $region3: #{tpu_custom_call.1} parent=1 // loop_header
      %s16 = sphi 0, %s20
      %p17 = scmp.ge.s32.totalorder %s16, 4
      %s26 = sphi 0, %s28
      %s29 = sphi 0, %s26
      %s30 = sphi 0, %s29
      %s46 = sphi 0, %s30
      %s50 = sphi 0, %s50
      %s52 = sphi 0, %s50
      %s53 = sphi 0, %s52
      %s67 = sphi 0, %s53
      %s71 = sphi 0, %s71
      %s73 = sphi 0, %s71
      %s74 = sphi 0, %s73
      %s88 = sphi 0, %s74
      %s92 = sphi 0, %s92
      %s94 = sphi 0, %s92
      %s95 = sphi 0, %s94
      %s109 = sphi 0, %s95
      %s113 = sphi 0, %s113
      %s115 = sphi 0, %s113
      %s116 = sphi 0, %s115
      %s130 = sphi 0, %s116
      %s134 = sphi 0, %s134
      %s136 = sphi 0, %s134
      %s137 = sphi 0, %s136
      %s151 = sphi 0, %s137
      %s155 = sphi 0, %s155
      %s157 = sphi 0, %s155
      %s158 = sphi 0, %s157
      %s172 = sphi 0, %s158
      %s178 = sphi 0, %s180
      %s181 = sphi 0, %s178
      %s182 = sphi 0, %s181
      %s198 = sphi 0, %s182
    $region4: #{tpu_custom_call.1} parent=1 // loop_header_branch
      %19 = sbr.rel (%p17) target = $region8
    $region5: #{tpu_custom_call.1} parent=1 // loop_body
      %s21 = ssub.s32 %s16, 1
      %s22 = ssub.s32 %s16, 2
      %s23 = sadd.s32 %s16, 1
      %s24 = ssub.s32 %s16, %s23
      %p25 = scmp.eq.s32.totalorder %s24, 0
      %s27 = sadd.s32 %s26, 1
      %s28 = scalar_select %p25, %s26, %s27
      %p31 = pneg %p25
      %p32 = scmp.eq.s32.totalorder %s16, 1
      %p33 = por %p31, %p32
      %p34 = scmp.ne.s32.totalorder %s26, %s29
      %p35 = scmp.eq.s32.totalorder %s16, 0
      %p36 = por %p34, %p35
      %p37 = scmp.ne.s32.totalorder %s26, %s29
      %p38 = scmp.eq.s32.totalorder %s21, 1
      %p39 = por %p37, %p38
      %p40 = scmp.ne.s32.totalorder %s29, %s30
      %p41 = scmp.eq.s32.totalorder %s21, 0
      %p42 = por %p40, %p41
      %p43 = scmp.ne.s32.totalorder %s29, %s30
      %p44 = scmp.eq.s32.totalorder %s22, 1
      %p45 = por %p43, %p44
      %p47 = scmp.ne.s32.totalorder %s30, %s46
      %p48 = scmp.eq.s32.totalorder %s22, 0
      %p49 = por %p47, %p48
      %s51 = sadd.s32 %s50, 1
      %p54 = scmp.eq.s32.totalorder %s16, 1
      %p55 = scmp.ne.s32.totalorder %s50, %s52
      %p56 = scmp.eq.s32.totalorder %s16, 0
      %p57 = por %p55, %p56
      %p58 = scmp.ne.s32.totalorder %s50, %s52
      %p59 = scmp.eq.s32.totalorder %s21, 1
      %p60 = por %p58, %p59
      %p61 = scmp.ne.s32.totalorder %s52, %s53
      %p62 = scmp.eq.s32.totalorder %s21, 0
      %p63 = por %p61, %p62
      %p64 = scmp.ne.s32.totalorder %s52, %s53
      %p65 = scmp.eq.s32.totalorder %s22, 1
      %p66 = por %p64, %p65
      %p68 = scmp.ne.s32.totalorder %s53, %s67
      %p69 = scmp.eq.s32.totalorder %s22, 0
      %p70 = por %p68, %p69
      %s72 = sadd.s32 %s71, 1
      %p75 = scmp.eq.s32.totalorder %s16, 1
      %p76 = scmp.ne.s32.totalorder %s71, %s73
      %p77 = scmp.eq.s32.totalorder %s16, 0
      %p78 = por %p76, %p77
      %p79 = scmp.ne.s32.totalorder %s71, %s73
      %p80 = scmp.eq.s32.totalorder %s21, 1
      %p81 = por %p79, %p80
      %p82 = scmp.ne.s32.totalorder %s73, %s74
      %p83 = scmp.eq.s32.totalorder %s21, 0
      %p84 = por %p82, %p83
      %p85 = scmp.ne.s32.totalorder %s73, %s74
      %p86 = scmp.eq.s32.totalorder %s22, 1
      %p87 = por %p85, %p86
      %p89 = scmp.ne.s32.totalorder %s74, %s88
      %p90 = scmp.eq.s32.totalorder %s22, 0
      %p91 = por %p89, %p90
      %s93 = sadd.s32 %s92, 1
      %p96 = scmp.eq.s32.totalorder %s16, 1
      %p97 = scmp.ne.s32.totalorder %s92, %s94
      %p98 = scmp.eq.s32.totalorder %s16, 0
      %p99 = por %p97, %p98
      %p100 = scmp.ne.s32.totalorder %s92, %s94
      %p101 = scmp.eq.s32.totalorder %s21, 1
      %p102 = por %p100, %p101
      %p103 = scmp.ne.s32.totalorder %s94, %s95
      %p104 = scmp.eq.s32.totalorder %s21, 0
      %p105 = por %p103, %p104
      %p106 = scmp.ne.s32.totalorder %s94, %s95
      %p107 = scmp.eq.s32.totalorder %s22, 1
      %p108 = por %p106, %p107
      %p110 = scmp.ne.s32.totalorder %s95, %s109
      %p111 = scmp.eq.s32.totalorder %s22, 0
      %p112 = por %p110, %p111
      %s114 = sadd.s32 %s113, 1
      %p117 = scmp.eq.s32.totalorder %s16, 1
      %p118 = scmp.ne.s32.totalorder %s113, %s115
      %p119 = scmp.eq.s32.totalorder %s16, 0
      %p120 = por %p118, %p119
      %p121 = scmp.ne.s32.totalorder %s113, %s115
      %p122 = scmp.eq.s32.totalorder %s21, 1
      %p123 = por %p121, %p122
      %p124 = scmp.ne.s32.totalorder %s115, %s116
      %p125 = scmp.eq.s32.totalorder %s21, 0
      %p126 = por %p124, %p125
      %p127 = scmp.ne.s32.totalorder %s115, %s116
      %p128 = scmp.eq.s32.totalorder %s22, 1
      %p129 = por %p127, %p128
      %p131 = scmp.ne.s32.totalorder %s116, %s130
      %p132 = scmp.eq.s32.totalorder %s22, 0
      %p133 = por %p131, %p132
      %s135 = sadd.s32 %s134, 1
      %p138 = scmp.eq.s32.totalorder %s16, 1
      %p139 = scmp.ne.s32.totalorder %s134, %s136
      %p140 = scmp.eq.s32.totalorder %s16, 0
      %p141 = por %p139, %p140
      %p142 = scmp.ne.s32.totalorder %s134, %s136
      %p143 = scmp.eq.s32.totalorder %s21, 1
      %p144 = por %p142, %p143
      %p145 = scmp.ne.s32.totalorder %s136, %s137
      %p146 = scmp.eq.s32.totalorder %s21, 0
      %p147 = por %p145, %p146
      %p148 = scmp.ne.s32.totalorder %s136, %s137
      %p149 = scmp.eq.s32.totalorder %s22, 1
      %p150 = por %p148, %p149
      %p152 = scmp.ne.s32.totalorder %s137, %s151
      %p153 = scmp.eq.s32.totalorder %s22, 0
      %p154 = por %p152, %p153
      %s156 = sadd.s32 %s155, 1
      %p159 = scmp.eq.s32.totalorder %s16, 1
      %p160 = scmp.ne.s32.totalorder %s155, %s157
      %p161 = scmp.eq.s32.totalorder %s16, 0
      %p162 = por %p160, %p161
      %p163 = scmp.ne.s32.totalorder %s155, %s157
      %p164 = scmp.eq.s32.totalorder %s21, 1
      %p165 = por %p163, %p164
      %p166 = scmp.ne.s32.totalorder %s157, %s158
      %p167 = scmp.eq.s32.totalorder %s21, 0
      %p168 = por %p166, %p167
      %p169 = scmp.ne.s32.totalorder %s157, %s158
      %p170 = scmp.eq.s32.totalorder %s22, 1
      %p171 = por %p169, %p170
      %p173 = scmp.ne.s32.totalorder %s158, %s172
      %p174 = scmp.eq.s32.totalorder %s22, 0
      %p175 = por %p173, %p174
      %s176 = ssub.s32 %s16, %s23
      %p177 = scmp.eq.s32.totalorder %s176, 0
      %s179 = sadd.s32 %s178, 1
      %s180 = scalar_select %p177, %s178, %s179
      %p183 = pneg %p177
      %p184 = scmp.eq.s32.totalorder %s16, 1
      %p185 = por %p183, %p184
      %p186 = scmp.ne.s32.totalorder %s178, %s181
      %p187 = scmp.eq.s32.totalorder %s16, 0
      %p188 = por %p186, %p187
      %p189 = scmp.ne.s32.totalorder %s178, %s181
      %p190 = scmp.eq.s32.totalorder %s21, 1
      %p191 = por %p189, %p190
      %p192 = scmp.ne.s32.totalorder %s181, %s182
      %p193 = scmp.eq.s32.totalorder %s21, 0
      %p194 = por %p192, %p193
      %p195 = scmp.ne.s32.totalorder %s181, %s182
      %p196 = scmp.eq.s32.totalorder %s22, 1
      %p197 = por %p195, %p196
      %p199 = scmp.ne.s32.totalorder %s182, %s198
      %p200 = scmp.eq.s32.totalorder %s22, 0
      %p201 = por %p199, %p200
      %p202 = scmp.le.s32.totalorder 1, %s16
      %p203 = scmp.lt.s32.totalorder %s16, 3
      %p204 = pnand %p202, %p203
      %p205 = pneg %p204
      // Predicated region
      $region9: #{tpu_custom_call.1} parent=5 // pred_check
        _
      $region10: #{tpu_custom_call.1} parent=5 // pred_check_branch
        %207 = sbr.rel (%p204) target = $region12
      $region11: #{tpu_custom_call.1} parent=5 // pred_region
        %s208 = ssub.s32 %s16, 1
        // Predicated region
        $region13: #{tpu_custom_call.1} parent=11 // pred_check
          %p209 = pneg %p63
        $region14: #{tpu_custom_call.1} parent=11 // pred_check_branch
          %211 = sbr.rel (%p209) target = $region16
        $region15: #{tpu_custom_call.1} parent=11 // pred_region
          _
        $region16: #{tpu_custom_call.1} parent=11 // pred_fallthru
          _
        // Predicated region
        $region17: #{tpu_custom_call.1} parent=11 // pred_check
          %p212 = pneg %p84
        $region18: #{tpu_custom_call.1} parent=11 // pred_check_branch
          %214 = sbr.rel (%p212) target = $region20
        $region19: #{tpu_custom_call.1} parent=11 // pred_region
          _
        $region20: #{tpu_custom_call.1} parent=11 // pred_fallthru
          _
        // Predicated region
        $region21: #{tpu_custom_call.1} parent=11 // pred_check
          %p215 = pneg %p105
        $region22: #{tpu_custom_call.1} parent=11 // pred_check_branch
          %217 = sbr.rel (%p215) target = $region24
        $region23: #{tpu_custom_call.1} parent=11 // pred_region
          _
        $region24: #{tpu_custom_call.1} parent=11 // pred_fallthru
          _
        // Predicated region
        $region25: #{tpu_custom_call.1} parent=11 // pred_check
          %p218 = pneg %p126
        $region26: #{tpu_custom_call.1} parent=11 // pred_check_branch
          %220 = sbr.rel (%p218) target = $region28
        $region27: #{tpu_custom_call.1} parent=11 // pred_region
          _
        $region28: #{tpu_custom_call.1} parent=11 // pred_fallthru
          _
        // Predicated region
        $region29: #{tpu_custom_call.1} parent=11 // pred_check
          %p221 = pneg %p147
        $region30: #{tpu_custom_call.1} parent=11 // pred_check_branch
          %223 = sbr.rel (%p221) target = $region32
        $region31: #{tpu_custom_call.1} parent=11 // pred_region
          _
        $region32: #{tpu_custom_call.1} parent=11 // pred_fallthru
          _
        // Predicated region
        $region33: #{tpu_custom_call.1} parent=11 // pred_check
          %p224 = pneg %p168
        $region34: #{tpu_custom_call.1} parent=11 // pred_check_branch
          %226 = sbr.rel (%p224) target = $region36
        $region35: #{tpu_custom_call.1} parent=11 // pred_region
          _
        $region36: #{tpu_custom_call.1} parent=11 // pred_fallthru
          _
      $region12: #{tpu_custom_call.1} parent=5 // pred_fallthru
        _
      %p227 = scmp.lt.s32.totalorder %s16, 2
      // Predicated region
      $region37: #{tpu_custom_call.1} parent=5 // pred_check
        %p228 = pneg %p227
      $region38: #{tpu_custom_call.1} parent=5 // pred_check_branch
        %230 = sbr.rel (%p228) target = $region40
      $region39: #{tpu_custom_call.1} parent=5 // pred_region
        // Predicated region
        $region41: #{tpu_custom_call.1} parent=39 // pred_check
          %p231 = pneg %p36
        $region42: #{tpu_custom_call.1} parent=39 // pred_check_branch
          %233 = sbr.rel (%p231) target = $region44
        $region43: #{tpu_custom_call.1} parent=39 // pred_region
          %s234 = smul.u32 2, %s16
          %p235 = scmp.lt.s32.totalorder %s234, 3
          %s236 = scalar_select %p235, %s234, 3
          %s237 = smul.addr %s236, 16
          %s238 = smul.addr %s237, 4
          %s239 = scalar_lea.vmem %s0, %s238
          %s240 = smul.u32 2, %s16
        $region44: #{tpu_custom_call.1} parent=39 // pred_fallthru
          _
      $region40: #{tpu_custom_call.1} parent=5 // pred_fallthru
        _
      %p241 = scmp.le.s32.totalorder 1, %s16
      %p242 = scmp.lt.s32.totalorder %s16, 3
      %p243 = pnand %p241, %p242
      %p244 = pneg %p243
      // Predicated region
      $region45: #{tpu_custom_call.1} parent=5 // pred_check
        _
      $region46: #{tpu_custom_call.1} parent=5 // pred_check_branch
        %246 = sbr.rel (%p243) target = $region48
      $region47: #{tpu_custom_call.1} parent=5 // pred_region
        %s247 = ssub.s32 %s16, 1
        %s248 = smul.u32 2, %s21
        %p249 = scmp.lt.s32.totalorder %s248, 3
        %s250 = scalar_select %p249, %s248, 3
        %s251 = smul.addr %s250, 16
        %s252 = smul.addr %s251, 4
        %s253 = scalar_lea.vmem %s0, %s252
        %p254 = pneg %p42
        %p255 = pneg %p39
        %p256 = pneg %p63
        %p257 = pneg %p60
        %p258 = pneg %p84
        %p259 = pneg %p81
        %p260 = pneg %p105
        %p261 = pneg %p102
        %p262 = pneg %p126
        %p263 = pneg %p123
        %p264 = pneg %p147
        %p265 = pneg %p144
        %p266 = pneg %p168
        %p267 = pneg %p165
        %p268 = pneg %p194
        %p269 = pneg %p191
        %s270 = sand.u32 %s181, 1
        %s271 = scalar_lea.sflag [#allocation3], %s270
        %s272 = sand.u32 %s181, 1
        %s273 = smul.addr %s272, 4
        %s274 = scalar_lea.vmem [#allocation2], %s273
        %s275 = smul.u32 2, %s21
        %p276 = scmp.lt.s32.totalorder %s275, 3
        %s277 = scalar_select %p276, %s275, 3
        %s278 = smul.addr %s277, 16
        %s279 = smul.addr %s278, 4
        %s280 = scalar_lea.vmem %s0, %s279
        %s281 = smul.u32 2, %s21
        %s282 = smul.u32 2, %s21
        %v284 = vld [vmem:[%s280] sm:$0xff]
        %v285 = vld [vmem:[%s280 + $0x8] sm:$0xff]
        %v286 = vld [vmem:[%s280 + $0x10] sm:$0xff]
        %v287 = vld [vmem:[%s280 + $0x18] sm:$0xff]
        %v288 = vld [vmem:[%s280 + $0x20] sm:$0xff]
        %v289 = vld [vmem:[%s280 + $0x28] sm:$0xff]
        %v290 = vld [vmem:[%s280 + $0x30] sm:$0xff]
        %v291 = vld [vmem:[%s280 + $0x38] sm:$0xff]
        %v292 = vld [vmem:[%s280 + $0x40] sm:$0xff]
        %v293 = vld [vmem:[%s280 + $0x48] sm:$0xff]
        %v294 = vld [vmem:[%s280 + $0x50] sm:$0xff]
        %v295 = vld [vmem:[%s280 + $0x58] sm:$0xff]
        %v296 = vld [vmem:[%s280 + $0x60] sm:$0xff]
        %v297 = vld [vmem:[%s280 + $0x68] sm:$0xff]
        %v298 = vld [vmem:[%s280 + $0x70] sm:$0xff]
        %v299 = vld [vmem:[%s280 + $0x78] sm:$0xff]
        %v300 = vld [vmem:[%s1] sm:$0xf]
        %v301 = vld [vmem:[%s1 + $0x4] sm:$0xf]
        %v302 = vld [vmem:[%s1 + $0x8] sm:$0xf]
        %v303 = vld [vmem:[%s1 + $0xc] sm:$0xf]
        %v304 = vld [vmem:[%s1 + $0x10] sm:$0xf]
        %v305 = vld [vmem:[%s1 + $0x14] sm:$0xf]
        %v306 = vld [vmem:[%s1 + $0x18] sm:$0xf]
        %v307 = vld [vmem:[%s1 + $0x1c] sm:$0xf]
        %v308 = vld [vmem:[%s1 + $0x20] sm:$0xf]
        %v309 = vld [vmem:[%s1 + $0x24] sm:$0xf]
        %v310 = vld [vmem:[%s1 + $0x28] sm:$0xf]
        %v311 = vld [vmem:[%s1 + $0x2c] sm:$0xf]
        %v312 = vld [vmem:[%s1 + $0x30] sm:$0xf]
        %v313 = vld [vmem:[%s1 + $0x34] sm:$0xf]
        %v314 = vld [vmem:[%s1 + $0x38] sm:$0xf]
        %v315 = vld [vmem:[%s1 + $0x3c] sm:$0xf]
        %v316 = vld [vmem:[%s1 + $0x40] sm:$0xf]
        %v317 = vld [vmem:[%s1 + $0x44] sm:$0xf]
        %v318 = vld [vmem:[%s1 + $0x48] sm:$0xf]
        %v319 = vld [vmem:[%s1 + $0x4c] sm:$0xf]
        %v320 = vld [vmem:[%s1 + $0x50] sm:$0xf]
        %v321 = vld [vmem:[%s1 + $0x54] sm:$0xf]
        %v322 = vld [vmem:[%s1 + $0x58] sm:$0xf]
        %v323 = vld [vmem:[%s1 + $0x5c] sm:$0xf]
        %v324 = vld [vmem:[%s1 + $0x60] sm:$0xf]
        %v325 = vld [vmem:[%s1 + $0x64] sm:$0xf]
        %v326 = vld [vmem:[%s1 + $0x68] sm:$0xf]
        %v327 = vld [vmem:[%s1 + $0x6c] sm:$0xf]
        %v328 = vld [vmem:[%s1 + $0x70] sm:$0xf]
        %v329 = vld [vmem:[%s1 + $0x74] sm:$0xf]
        %v330 = vld [vmem:[%s1 + $0x78] sm:$0xf]
        %v331 = vld [vmem:[%s1 + $0x7c] sm:$0xf]
        %v332 = vld [vmem:[%s1 + $0x80] sm:$0xf]
        %v333 = vld [vmem:[%s1 + $0x84] sm:$0xf]
        %v334 = vld [vmem:[%s1 + $0x88] sm:$0xf]
        %v335 = vld [vmem:[%s1 + $0x8c] sm:$0xf]
        %v336 = vld [vmem:[%s1 + $0x90] sm:$0xf]
        %v337 = vld [vmem:[%s1 + $0x94] sm:$0xf]
        %v338 = vld [vmem:[%s1 + $0x98] sm:$0xf]
        %v339 = vld [vmem:[%s1 + $0x9c] sm:$0xf]
        %v340 = vld [vmem:[%s1 + $0xa0] sm:$0xf]
        %v341 = vld [vmem:[%s1 + $0xa4] sm:$0xf]
        %v342 = vld [vmem:[%s1 + $0xa8] sm:$0xf]
        %v343 = vld [vmem:[%s1 + $0xac] sm:$0xf]
        %v344 = vld [vmem:[%s1 + $0xb0] sm:$0xf]
        %v345 = vld [vmem:[%s1 + $0xb4] sm:$0xf]
        %v346 = vld [vmem:[%s1 + $0xb8] sm:$0xf]
        %v347 = vld [vmem:[%s1 + $0xbc] sm:$0xf]
        %v348 = vld [vmem:[%s1 + $0xc0] sm:$0xf]
        %v349 = vld [vmem:[%s1 + $0xc4] sm:$0xf]
        %v350 = vld [vmem:[%s1 + $0xc8] sm:$0xf]
        %v351 = vld [vmem:[%s1 + $0xcc] sm:$0xf]
        %v352 = vld [vmem:[%s1 + $0xd0] sm:$0xf]
        %v353 = vld [vmem:[%s1 + $0xd4] sm:$0xf]
        %v354 = vld [vmem:[%s1 + $0xd8] sm:$0xf]
        %v355 = vld [vmem:[%s1 + $0xdc] sm:$0xf]
        %v356 = vld [vmem:[%s1 + $0xe0] sm:$0xf]
        %v357 = vld [vmem:[%s1 + $0xe4] sm:$0xf]
        %v358 = vld [vmem:[%s1 + $0xe8] sm:$0xf]
        %v359 = vld [vmem:[%s1 + $0xec] sm:$0xf]
        %v360 = vld [vmem:[%s1 + $0xf0] sm:$0xf]
        %v361 = vld [vmem:[%s1 + $0xf4] sm:$0xf]
        %v362 = vld [vmem:[%s1 + $0xf8] sm:$0xf]
        %v363 = vld [vmem:[%s1 + $0xfc] sm:$0xf]
        %v364 = vld [vmem:[%s1 + $0x100] sm:$0xf]
        %v365 = vld [vmem:[%s1 + $0x104] sm:$0xf]
        %v366 = vld [vmem:[%s1 + $0x108] sm:$0xf]
        %v367 = vld [vmem:[%s1 + $0x10c] sm:$0xf]
        %v368 = vld [vmem:[%s1 + $0x110] sm:$0xf]
        %v369 = vld [vmem:[%s1 + $0x114] sm:$0xf]
        %v370 = vld [vmem:[%s1 + $0x118] sm:$0xf]
        %v371 = vld [vmem:[%s1 + $0x11c] sm:$0xf]
        %v372 = vld [vmem:[%s1 + $0x120] sm:$0xf]
        %v373 = vld [vmem:[%s1 + $0x124] sm:$0xf]
        %v374 = vld [vmem:[%s1 + $0x128] sm:$0xf]
        %v375 = vld [vmem:[%s1 + $0x12c] sm:$0xf]
        %v376 = vld [vmem:[%s1 + $0x130] sm:$0xf]
        %v377 = vld [vmem:[%s1 + $0x134] sm:$0xf]
        %v378 = vld [vmem:[%s1 + $0x138] sm:$0xf]
        %v379 = vld [vmem:[%s1 + $0x13c] sm:$0xf]
        %v380 = vld [vmem:[%s1 + $0x140] sm:$0xf]
        %v381 = vld [vmem:[%s1 + $0x144] sm:$0xf]
        %v382 = vld [vmem:[%s1 + $0x148] sm:$0xf]
        %v383 = vld [vmem:[%s1 + $0x14c] sm:$0xf]
        %v384 = vld [vmem:[%s1 + $0x150] sm:$0xf]
        %v385 = vld [vmem:[%s1 + $0x154] sm:$0xf]
        %v386 = vld [vmem:[%s1 + $0x158] sm:$0xf]
        %v387 = vld [vmem:[%s1 + $0x15c] sm:$0xf]
        %v388 = vld [vmem:[%s1 + $0x160] sm:$0xf]
        %v389 = vld [vmem:[%s1 + $0x164] sm:$0xf]
        %v390 = vld [vmem:[%s1 + $0x168] sm:$0xf]
        %v391 = vld [vmem:[%s1 + $0x16c] sm:$0xf]
        %v392 = vld [vmem:[%s1 + $0x170] sm:$0xf]
        %v393 = vld [vmem:[%s1 + $0x174] sm:$0xf]
        %v394 = vld [vmem:[%s1 + $0x178] sm:$0xf]
        %v395 = vld [vmem:[%s1 + $0x17c] sm:$0xf]
        %v396 = vld [vmem:[%s1 + $0x180] sm:$0xf]
        %v397 = vld [vmem:[%s1 + $0x184] sm:$0xf]
        %v398 = vld [vmem:[%s1 + $0x188] sm:$0xf]
        %v399 = vld [vmem:[%s1 + $0x18c] sm:$0xf]
        %v400 = vld [vmem:[%s1 + $0x190] sm:$0xf]
        %v401 = vld [vmem:[%s1 + $0x194] sm:$0xf]
        %v402 = vld [vmem:[%s1 + $0x198] sm:$0xf]
        %v403 = vld [vmem:[%s1 + $0x19c] sm:$0xf]
        %v404 = vld [vmem:[%s1 + $0x1a0] sm:$0xf]
        %v405 = vld [vmem:[%s1 + $0x1a4] sm:$0xf]
        %v406 = vld [vmem:[%s1 + $0x1a8] sm:$0xf]
        %v407 = vld [vmem:[%s1 + $0x1ac] sm:$0xf]
        %v408 = vld [vmem:[%s1 + $0x1b0] sm:$0xf]
        %v409 = vld [vmem:[%s1 + $0x1b4] sm:$0xf]
        %v410 = vld [vmem:[%s1 + $0x1b8] sm:$0xf]
        %v411 = vld [vmem:[%s1 + $0x1bc] sm:$0xf]
        %v412 = vld [vmem:[%s1 + $0x1c0] sm:$0xf]
        %v413 = vld [vmem:[%s1 + $0x1c4] sm:$0xf]
        %v414 = vld [vmem:[%s1 + $0x1c8] sm:$0xf]
        %v415 = vld [vmem:[%s1 + $0x1cc] sm:$0xf]
        %v416 = vld [vmem:[%s1 + $0x1d0] sm:$0xf]
        %v417 = vld [vmem:[%s1 + $0x1d4] sm:$0xf]
        %v418 = vld [vmem:[%s1 + $0x1d8] sm:$0xf]
        %v419 = vld [vmem:[%s1 + $0x1dc] sm:$0xf]
        %v420 = vld [vmem:[%s1 + $0x1e0] sm:$0xf]
        %v421 = vld [vmem:[%s1 + $0x1e4] sm:$0xf]
        %v422 = vld [vmem:[%s1 + $0x1e8] sm:$0xf]
        %v423 = vld [vmem:[%s1 + $0x1ec] sm:$0xf]
        %v424 = vld [vmem:[%s1 + $0x1f0] sm:$0xf]
        %v425 = vld [vmem:[%s1 + $0x1f4] sm:$0xf]
        %v426 = vld [vmem:[%s1 + $0x1f8] sm:$0xf]
        %v427 = vld [vmem:[%s1 + $0x1fc] sm:$0xf]
        %v428 = vld [vmem:[%s2] sm:$0x1]
        %v430 = vlaneseq
        %v431 = vshrl.u32 %v430, 7
        %v432 = vsub.s32 0, %v431
        %v433 = vrot.slane %v428, %v432
        %v451 = vunpack.c.l.b16 %v284
        %v452 = vunpack.c.h.b16 %v284
        %v453 = vunpack.c.l.b16 %v285
        %v454 = vunpack.c.h.b16 %v285
        %v455 = vunpack.c.l.b16 %v286
        %v456 = vunpack.c.h.b16 %v286
        %v457 = vunpack.c.l.b16 %v287
        %v458 = vunpack.c.h.b16 %v287
        %v459 = vunpack.c.l.b16 %v288
        %v460 = vunpack.c.h.b16 %v288
        %v461 = vunpack.c.l.b16 %v289
        %v462 = vunpack.c.h.b16 %v289
        %v463 = vunpack.c.l.b16 %v290
        %v464 = vunpack.c.h.b16 %v290
        %v465 = vunpack.c.l.b16 %v291
        %v466 = vunpack.c.h.b16 %v291
        %v467 = vunpack.c.l.b16 %v292
        %v468 = vunpack.c.h.b16 %v292
        %v469 = vunpack.c.l.b16 %v293
        %v470 = vunpack.c.h.b16 %v293
        %v471 = vunpack.c.l.b16 %v294
        %v472 = vunpack.c.h.b16 %v294
        %v473 = vunpack.c.l.b16 %v295
        %v474 = vunpack.c.h.b16 %v295
        %v475 = vunpack.c.l.b16 %v296
        %v476 = vunpack.c.h.b16 %v296
        %v477 = vunpack.c.l.b16 %v297
        %v478 = vunpack.c.h.b16 %v297
        %v479 = vunpack.c.l.b16 %v298
        %v480 = vunpack.c.h.b16 %v298
        %v481 = vunpack.c.l.b16 %v299
        %v482 = vunpack.c.h.b16 %v299
        %v483 = vpack.c.b16 %v459, %v451
        %v484 = vpack.c.b16 %v460, %v452
        %v485 = vpack.c.b16 %v461, %v453
        %v486 = vpack.c.b16 %v462, %v454
        %v487 = vpack.c.b16 %v463, %v455
        %v488 = vpack.c.b16 %v464, %v456
        %v489 = vpack.c.b16 %v465, %v457
        %v490 = vpack.c.b16 %v466, %v458
        %v491 = vpack.c.b16 %v475, %v467
        %v492 = vpack.c.b16 %v476, %v468
        %v493 = vpack.c.b16 %v477, %v469
        %v494 = vpack.c.b16 %v478, %v470
        %v495 = vpack.c.b16 %v479, %v471
        %v496 = vpack.c.b16 %v480, %v472
        %v497 = vpack.c.b16 %v481, %v473
        %v498 = vpack.c.b16 %v482, %v474
        %v643 = vunpack.c.l.b16 %v300
        %v644 = vunpack.c.l.b16 %v301
        %v645 = vunpack.c.l.b16 %v302
        %v646 = vunpack.c.l.b16 %v303
        %v647 = vunpack.c.l.b16 %v304
        %v648 = vunpack.c.l.b16 %v305
        %v649 = vunpack.c.l.b16 %v306
        %v650 = vunpack.c.l.b16 %v307
        %v651 = vunpack.c.l.b16 %v308
        %v652 = vunpack.c.l.b16 %v309
        %v653 = vunpack.c.l.b16 %v310
        %v654 = vunpack.c.l.b16 %v311
        %v655 = vunpack.c.l.b16 %v312
        %v656 = vunpack.c.l.b16 %v313
        %v657 = vunpack.c.l.b16 %v314
        %v658 = vunpack.c.l.b16 %v315
        %v659 = vunpack.c.l.b16 %v316
        %v660 = vunpack.c.l.b16 %v317
        %v661 = vunpack.c.l.b16 %v318
        %v662 = vunpack.c.l.b16 %v319
        %v663 = vunpack.c.l.b16 %v320
        %v664 = vunpack.c.l.b16 %v321
        %v665 = vunpack.c.l.b16 %v322
        %v666 = vunpack.c.l.b16 %v323
        %v667 = vunpack.c.l.b16 %v324
        %v668 = vunpack.c.l.b16 %v325
        %v669 = vunpack.c.l.b16 %v326
        %v670 = vunpack.c.l.b16 %v327
        %v671 = vunpack.c.l.b16 %v328
        %v672 = vunpack.c.l.b16 %v329
        %v673 = vunpack.c.l.b16 %v330
        %v674 = vunpack.c.l.b16 %v331
        %v675 = vunpack.c.l.b16 %v332
        %v676 = vunpack.c.l.b16 %v333
        %v677 = vunpack.c.l.b16 %v334
        %v678 = vunpack.c.l.b16 %v335
        %v679 = vunpack.c.l.b16 %v336
        %v680 = vunpack.c.l.b16 %v337
        %v681 = vunpack.c.l.b16 %v338
        %v682 = vunpack.c.l.b16 %v339
        %v683 = vunpack.c.l.b16 %v340
        %v684 = vunpack.c.l.b16 %v341
        %v685 = vunpack.c.l.b16 %v342
        %v686 = vunpack.c.l.b16 %v343
        %v687 = vunpack.c.l.b16 %v344
        %v688 = vunpack.c.l.b16 %v345
        %v689 = vunpack.c.l.b16 %v346
        %v690 = vunpack.c.l.b16 %v347
        %v691 = vunpack.c.l.b16 %v348
        %v692 = vunpack.c.l.b16 %v349
        %v693 = vunpack.c.l.b16 %v350
        %v694 = vunpack.c.l.b16 %v351
        %v695 = vunpack.c.l.b16 %v352
        %v696 = vunpack.c.l.b16 %v353
        %v697 = vunpack.c.l.b16 %v354
        %v698 = vunpack.c.l.b16 %v355
        %v699 = vunpack.c.l.b16 %v356
        %v700 = vunpack.c.l.b16 %v357
        %v701 = vunpack.c.l.b16 %v358
        %v702 = vunpack.c.l.b16 %v359
        %v703 = vunpack.c.l.b16 %v360
        %v704 = vunpack.c.l.b16 %v361
        %v705 = vunpack.c.l.b16 %v362
        %v706 = vunpack.c.l.b16 %v363
        %v707 = vunpack.c.l.b16 %v364
        %v708 = vunpack.c.l.b16 %v365
        %v709 = vunpack.c.l.b16 %v366
        %v710 = vunpack.c.l.b16 %v367
        %v711 = vunpack.c.l.b16 %v368
        %v712 = vunpack.c.l.b16 %v369
        %v713 = vunpack.c.l.b16 %v370
        %v714 = vunpack.c.l.b16 %v371
        %v715 = vunpack.c.l.b16 %v372
        %v716 = vunpack.c.l.b16 %v373
        %v717 = vunpack.c.l.b16 %v374
        %v718 = vunpack.c.l.b16 %v375
        %v719 = vunpack.c.l.b16 %v376
        %v720 = vunpack.c.l.b16 %v377
        %v721 = vunpack.c.l.b16 %v378
        %v722 = vunpack.c.l.b16 %v379
        %v723 = vunpack.c.l.b16 %v380
        %v724 = vunpack.c.l.b16 %v381
        %v725 = vunpack.c.l.b16 %v382
        %v726 = vunpack.c.l.b16 %v383
        %v727 = vunpack.c.l.b16 %v384
        %v728 = vunpack.c.l.b16 %v385
        %v729 = vunpack.c.l.b16 %v386
        %v730 = vunpack.c.l.b16 %v387
        %v731 = vunpack.c.l.b16 %v388
        %v732 = vunpack.c.l.b16 %v389
        %v733 = vunpack.c.l.b16 %v390
        %v734 = vunpack.c.l.b16 %v391
        %v735 = vunpack.c.l.b16 %v392
        %v736 = vunpack.c.l.b16 %v393
        %v737 = vunpack.c.l.b16 %v394
        %v738 = vunpack.c.l.b16 %v395
        %v739 = vunpack.c.l.b16 %v396
        %v740 = vunpack.c.l.b16 %v397
        %v741 = vunpack.c.l.b16 %v398
        %v742 = vunpack.c.l.b16 %v399
        %v743 = vunpack.c.l.b16 %v400
        %v744 = vunpack.c.l.b16 %v401
        %v745 = vunpack.c.l.b16 %v402
        %v746 = vunpack.c.l.b16 %v403
        %v747 = vunpack.c.l.b16 %v404
        %v748 = vunpack.c.l.b16 %v405
        %v749 = vunpack.c.l.b16 %v406
        %v750 = vunpack.c.l.b16 %v407
        %v751 = vunpack.c.l.b16 %v408
        %v752 = vunpack.c.l.b16 %v409
        %v753 = vunpack.c.l.b16 %v410
        %v754 = vunpack.c.l.b16 %v411
        %v755 = vunpack.c.l.b16 %v412
        %v756 = vunpack.c.l.b16 %v413
        %v757 = vunpack.c.l.b16 %v414
        %v758 = vunpack.c.l.b16 %v415
        %v759 = vunpack.c.l.b16 %v416
        %v760 = vunpack.c.l.b16 %v417
        %v761 = vunpack.c.l.b16 %v418
        %v762 = vunpack.c.l.b16 %v419
        %v763 = vunpack.c.l.b16 %v420
        %v764 = vunpack.c.l.b16 %v421
        %v765 = vunpack.c.l.b16 %v422
        %v766 = vunpack.c.l.b16 %v423
        %v767 = vunpack.c.l.b16 %v424
        %v768 = vunpack.c.l.b16 %v425
        %v769 = vunpack.c.l.b16 %v426
        %v770 = vunpack.c.l.b16 %v427
        %v771 = vpack.c.b16 %v644, %v643
        %v772 = vpack.c.b16 %v646, %v645
        %v773 = vpack.c.b16 %v648, %v647
        %v774 = vpack.c.b16 %v650, %v649
        %v775 = vpack.c.b16 %v652, %v651
        %v776 = vpack.c.b16 %v654, %v653
        %v777 = vpack.c.b16 %v656, %v655
        %v778 = vpack.c.b16 %v658, %v657
        %v779 = vpack.c.b16 %v660, %v659
        %v780 = vpack.c.b16 %v662, %v661
        %v781 = vpack.c.b16 %v664, %v663
        %v782 = vpack.c.b16 %v666, %v665
        %v783 = vpack.c.b16 %v668, %v667
        %v784 = vpack.c.b16 %v670, %v669
        %v785 = vpack.c.b16 %v672, %v671
        %v786 = vpack.c.b16 %v674, %v673
        %v787 = vpack.c.b16 %v676, %v675
        %v788 = vpack.c.b16 %v678, %v677
        %v789 = vpack.c.b16 %v680, %v679
        %v790 = vpack.c.b16 %v682, %v681
        %v791 = vpack.c.b16 %v684, %v683
        %v792 = vpack.c.b16 %v686, %v685
        %v793 = vpack.c.b16 %v688, %v687
        %v794 = vpack.c.b16 %v690, %v689
        %v795 = vpack.c.b16 %v692, %v691
        %v796 = vpack.c.b16 %v694, %v693
        %v797 = vpack.c.b16 %v696, %v695
        %v798 = vpack.c.b16 %v698, %v697
        %v799 = vpack.c.b16 %v700, %v699
        %v800 = vpack.c.b16 %v702, %v701
        %v801 = vpack.c.b16 %v704, %v703
        %v802 = vpack.c.b16 %v706, %v705
        %v803 = vpack.c.b16 %v708, %v707
        %v804 = vpack.c.b16 %v710, %v709
        %v805 = vpack.c.b16 %v712, %v711
        %v806 = vpack.c.b16 %v714, %v713
        %v807 = vpack.c.b16 %v716, %v715
        %v808 = vpack.c.b16 %v718, %v717
        %v809 = vpack.c.b16 %v720, %v719
        %v810 = vpack.c.b16 %v722, %v721
        %v811 = vpack.c.b16 %v724, %v723
        %v812 = vpack.c.b16 %v726, %v725
        %v813 = vpack.c.b16 %v728, %v727
        %v814 = vpack.c.b16 %v730, %v729
        %v815 = vpack.c.b16 %v732, %v731
        %v816 = vpack.c.b16 %v734, %v733
        %v817 = vpack.c.b16 %v736, %v735
        %v818 = vpack.c.b16 %v738, %v737
        %v819 = vpack.c.b16 %v740, %v739
        %v820 = vpack.c.b16 %v742, %v741
        %v821 = vpack.c.b16 %v744, %v743
        %v822 = vpack.c.b16 %v746, %v745
        %v823 = vpack.c.b16 %v748, %v747
        %v824 = vpack.c.b16 %v750, %v749
        %v825 = vpack.c.b16 %v752, %v751
        %v826 = vpack.c.b16 %v754, %v753
        %v827 = vpack.c.b16 %v756, %v755
        %v828 = vpack.c.b16 %v758, %v757
        %v829 = vpack.c.b16 %v760, %v759
        %v830 = vpack.c.b16 %v762, %v761
        %v831 = vpack.c.b16 %v764, %v763
        %v832 = vpack.c.b16 %v766, %v765
        %v833 = vpack.c.b16 %v768, %v767
        %v834 = vpack.c.b16 %v770, %v769
        %899 = vmatprep.subr.bf16.mxu0 0
        %900 = vmatpush1.bf16.msra.mxu0 %v771
        %901 = vmatprep.subr.bf16.mxu0 0
        %902 = vmatpush1.bf16.msra.mxu0 %v772
        %903 = vmatprep.subr.bf16.mxu0 0
        %904 = vmatpush1.bf16.msra.mxu0 %v773
        %905 = vmatprep.subr.bf16.mxu0 0
        %906 = vmatpush1.bf16.msra.mxu0 %v774
        %907 = vmatprep.subr.bf16.mxu0 0
        %908 = vmatpush1.bf16.msra.mxu0 %v775
        %909 = vmatprep.subr.bf16.mxu0 0
        %910 = vmatpush1.bf16.msra.mxu0 %v776
        %911 = vmatprep.subr.bf16.mxu0 0
        %912 = vmatpush1.bf16.msra.mxu0 %v777
        %913 = vmatprep.subr.bf16.mxu0 0
        %914 = vmatpush1.bf16.msra.mxu0 %v778
        %915 = vmatprep.subr.bf16.mxu0 0
        %916 = vmatpush1.bf16.msra.mxu0 %v779
        %917 = vmatprep.subr.bf16.mxu0 0
        %918 = vmatpush1.bf16.msra.mxu0 %v780
        %919 = vmatprep.subr.bf16.mxu0 0
        %920 = vmatpush1.bf16.msra.mxu0 %v781
        %921 = vmatprep.subr.bf16.mxu0 0
        %922 = vmatpush1.bf16.msra.mxu0 %v782
        %923 = vmatprep.subr.bf16.mxu0 0
        %924 = vmatpush1.bf16.msra.mxu0 %v783
        %925 = vmatprep.subr.bf16.mxu0 0
        %926 = vmatpush1.bf16.msra.mxu0 %v784
        %927 = vmatprep.subr.bf16.mxu0 0
        %928 = vmatpush1.bf16.msra.mxu0 %v785
        %929 = vmatprep.subr.bf16.mxu0 0
        %930 = vmatpush1.bf16.msra.mxu0 %v786
        %931 = vmatprep.mubr.bf16.mxu0 %v484
        %932 = vmatmul.mubr.bf16.gmra.mrb[0].mxu0 %v483
        %v933 = vpop.f32.mrb[0].mxu0
        %v934 = vadd.f32 %v433, %v933
        %v935 = vpop.f32.mrb[0].mxu0
        %v936 = vpop.f32.mrb[0].mxu0
        %v937 = vadd.f32 %v433, %v936
        %v938 = vpop.f32.mrb[0].mxu0
        %939 = vmatprep.mubr.bf16.mxu0 %v492
        %940 = vmatmul.mubr.bf16.gmra.mrb[0].mxu0 %v491
        %v941 = vpop.f32.mrb[0].mxu0
        %v942 = vadd.f32 %v433, %v941
        %v943 = vpop.f32.mrb[0].mxu0
        %v944 = vpop.f32.mrb[0].mxu0
        %v945 = vadd.f32 %v433, %v944
        %v946 = vpop.f32.mrb[0].mxu0
        %947 = vdwg.mxu0
        %948 = vmatprep.subr.bf16.mxu0 0
        %949 = vmatpush1.bf16.msra.mxu0 %v787
        %950 = vmatprep.subr.bf16.mxu0 0
        %951 = vmatpush1.bf16.msra.mxu0 %v788
        %952 = vmatprep.subr.bf16.mxu0 0
        %953 = vmatpush1.bf16.msra.mxu0 %v789
        %954 = vmatprep.subr.bf16.mxu0 0
        %955 = vmatpush1.bf16.msra.mxu0 %v790
        %956 = vmatprep.subr.bf16.mxu0 0
        %957 = vmatpush1.bf16.msra.mxu0 %v791
        %958 = vmatprep.subr.bf16.mxu0 0
        %959 = vmatpush1.bf16.msra.mxu0 %v792
        %960 = vmatprep.subr.bf16.mxu0 0
        %961 = vmatpush1.bf16.msra.mxu0 %v793
        %962 = vmatprep.subr.bf16.mxu0 0
        %963 = vmatpush1.bf16.msra.mxu0 %v794
        %964 = vmatprep.subr.bf16.mxu0 0
        %965 = vmatpush1.bf16.msra.mxu0 %v795
        %966 = vmatprep.subr.bf16.mxu0 0
        %967 = vmatpush1.bf16.msra.mxu0 %v796
        %968 = vmatprep.subr.bf16.mxu0 0
        %969 = vmatpush1.bf16.msra.mxu0 %v797
        %970 = vmatprep.subr.bf16.mxu0 0
        %971 = vmatpush1.bf16.msra.mxu0 %v798
        %972 = vmatprep.subr.bf16.mxu0 0
        %973 = vmatpush1.bf16.msra.mxu0 %v799
        %974 = vmatprep.subr.bf16.mxu0 0
        %975 = vmatpush1.bf16.msra.mxu0 %v800
        %976 = vmatprep.subr.bf16.mxu0 0
        %977 = vmatpush1.bf16.msra.mxu0 %v801
        %978 = vmatprep.subr.bf16.mxu0 0
        %979 = vmatpush1.bf16.msra.mxu0 %v802
        %980 = vmatprep.mubr.bf16.mxu0 %v486
        %981 = vmatmul.mubr.bf16.gmra.mrb[0].mxu0 %v485
        %v982 = vpop.f32.mrb[0].mxu0
        %v983 = vadd.f32 %v934, %v982
        %v984 = vpop.f32.mrb[0].mxu0
        %v985 = vpop.f32.mrb[0].mxu0
        %v986 = vadd.f32 %v937, %v985
        %v987 = vpop.f32.mrb[0].mxu0
        %988 = vmatprep.mubr.bf16.mxu0 %v494
        %989 = vmatmul.mubr.bf16.gmra.mrb[0].mxu0 %v493
        %v990 = vpop.f32.mrb[0].mxu0
        %v991 = vadd.f32 %v942, %v990
        %v992 = vpop.f32.mrb[0].mxu0
        %v993 = vpop.f32.mrb[0].mxu0
        %v994 = vadd.f32 %v945, %v993
        %v995 = vpop.f32.mrb[0].mxu0
        %996 = vdwg.mxu0
        %997 = vmatprep.subr.bf16.mxu0 0
        %998 = vmatpush1.bf16.msra.mxu0 %v803
        %999 = vmatprep.subr.bf16.mxu0 0
        %1000 = vmatpush1.bf16.msra.mxu0 %v804
        %1001 = vmatprep.subr.bf16.mxu0 0
        %1002 = vmatpush1.bf16.msra.mxu0 %v805
        %1003 = vmatprep.subr.bf16.mxu0 0
        %1004 = vmatpush1.bf16.msra.mxu0 %v806
        %1005 = vmatprep.subr.bf16.mxu0 0
        %1006 = vmatpush1.bf16.msra.mxu0 %v807
        %1007 = vmatprep.subr.bf16.mxu0 0
        %1008 = vmatpush1.bf16.msra.mxu0 %v808
        %1009 = vmatprep.subr.bf16.mxu0 0
        %1010 = vmatpush1.bf16.msra.mxu0 %v809
        %1011 = vmatprep.subr.bf16.mxu0 0
        %1012 = vmatpush1.bf16.msra.mxu0 %v810
        %1013 = vmatprep.subr.bf16.mxu0 0
        %1014 = vmatpush1.bf16.msra.mxu0 %v811
        %1015 = vmatprep.subr.bf16.mxu0 0
        %1016 = vmatpush1.bf16.msra.mxu0 %v812
        %1017 = vmatprep.subr.bf16.mxu0 0
        %1018 = vmatpush1.bf16.msra.mxu0 %v813
        %1019 = vmatprep.subr.bf16.mxu0 0
        %1020 = vmatpush1.bf16.msra.mxu0 %v814
        %1021 = vmatprep.subr.bf16.mxu0 0
        %1022 = vmatpush1.bf16.msra.mxu0 %v815
        %1023 = vmatprep.subr.bf16.mxu0 0
        %1024 = vmatpush1.bf16.msra.mxu0 %v816
        %1025 = vmatprep.subr.bf16.mxu0 0
        %1026 = vmatpush1.bf16.msra.mxu0 %v817
        %1027 = vmatprep.subr.bf16.mxu0 0
        %1028 = vmatpush1.bf16.msra.mxu0 %v818
        %1029 = vmatprep.mubr.bf16.mxu0 %v488
        %1030 = vmatmul.mubr.bf16.gmra.mrb[0].mxu0 %v487
        %v1031 = vpop.f32.mrb[0].mxu0
        %v1032 = vadd.f32 %v983, %v1031
        %v1033 = vpop.f32.mrb[0].mxu0
        %v1034 = vpop.f32.mrb[0].mxu0
        %v1035 = vadd.f32 %v986, %v1034
        %v1036 = vpop.f32.mrb[0].mxu0
        %1037 = vmatprep.mubr.bf16.mxu0 %v496
        %1038 = vmatmul.mubr.bf16.gmra.mrb[0].mxu0 %v495
        %v1039 = vpop.f32.mrb[0].mxu0
        %v1040 = vadd.f32 %v991, %v1039
        %v1041 = vpop.f32.mrb[0].mxu0
        %v1042 = vpop.f32.mrb[0].mxu0
        %v1043 = vadd.f32 %v994, %v1042
        %v1044 = vpop.f32.mrb[0].mxu0
        %1045 = vdwg.mxu0
        %1046 = vmatprep.subr.bf16.mxu0 0
        %1047 = vmatpush1.bf16.msra.mxu0 %v819
        %1048 = vmatprep.subr.bf16.mxu0 0
        %1049 = vmatpush1.bf16.msra.mxu0 %v820
        %1050 = vmatprep.subr.bf16.mxu0 0
        %1051 = vmatpush1.bf16.msra.mxu0 %v821
        %1052 = vmatprep.subr.bf16.mxu0 0
        %1053 = vmatpush1.bf16.msra.mxu0 %v822
        %1054 = vmatprep.subr.bf16.mxu0 0
        %1055 = vmatpush1.bf16.msra.mxu0 %v823
        %1056 = vmatprep.subr.bf16.mxu0 0
        %1057 = vmatpush1.bf16.msra.mxu0 %v824
        %1058 = vmatprep.subr.bf16.mxu0 0
        %1059 = vmatpush1.bf16.msra.mxu0 %v825
        %1060 = vmatprep.subr.bf16.mxu0 0
        %1061 = vmatpush1.bf16.msra.mxu0 %v826
        %1062 = vmatprep.subr.bf16.mxu0 0
        %1063 = vmatpush1.bf16.msra.mxu0 %v827
        %1064 = vmatprep.subr.bf16.mxu0 0
        %1065 = vmatpush1.bf16.msra.mxu0 %v828
        %1066 = vmatprep.subr.bf16.mxu0 0
        %1067 = vmatpush1.bf16.msra.mxu0 %v829
        %1068 = vmatprep.subr.bf16.mxu0 0
        %1069 = vmatpush1.bf16.msra.mxu0 %v830
        %1070 = vmatprep.subr.bf16.mxu0 0
        %1071 = vmatpush1.bf16.msra.mxu0 %v831
        %1072 = vmatprep.subr.bf16.mxu0 0
        %1073 = vmatpush1.bf16.msra.mxu0 %v832
        %1074 = vmatprep.subr.bf16.mxu0 0
        %1075 = vmatpush1.bf16.msra.mxu0 %v833
        %1076 = vmatprep.subr.bf16.mxu0 0
        %1077 = vmatpush1.bf16.msra.mxu0 %v834
        %1078 = vmatprep.mubr.bf16.mxu0 %v490
        %1079 = vmatmul.mubr.bf16.gmra.mrb[0].mxu0 %v489
        %v1080 = vpop.f32.mrb[0].mxu0
        %v1081 = vadd.f32 %v1032, %v1080
        %v1082 = vpop.f32.mrb[0].mxu0
        %v1083 = vpop.f32.mrb[0].mxu0
        %v1084 = vadd.f32 %v1035, %v1083
        %v1085 = vpop.f32.mrb[0].mxu0
        %1086 = vmatprep.mubr.bf16.mxu0 %v498
        %1087 = vmatmul.mubr.bf16.gmra.mrb[0].mxu0 %v497
        %v1088 = vpop.f32.mrb[0].mxu0
        %v1089 = vadd.f32 %v1040, %v1088
        %v1090 = vpop.f32.mrb[0].mxu0
        %v1091 = vpop.f32.mrb[0].mxu0
        %v1092 = vadd.f32 %v1043, %v1091
        %v1093 = vpop.f32.mrb[0].mxu0
        %1094 = vdwg.mxu0
        %vm1095 = vcmask 261120
        %v1096 = vsel %vm1095, %v1081, 0.0
        %1097 = vadd.xlane.f32.xlu0 %v1096
        %v1098 = vpop.xlane.xlu0 %1097
        %v1099 = vsel %vm1095, %v1084, 0.0
        %1100 = vadd.xlane.f32.xlu0 %v1099
        %v1101 = vpop.xlane.xlu0 %1100
        %v1102 = vsel %vm1095, %v1089, 0.0
        %1103 = vadd.xlane.f32.xlu0 %v1102
        %v1104 = vpop.xlane.xlu0 %1103
        %v1105 = vsel %vm1095, %v1092, 0.0
        %1106 = vadd.xlane.f32.xlu0 %v1105
        %v1107 = vpop.xlane.xlu0 %1106
        %v1108 = vrcp.pop 32.0
        %v1109 = vmul.f32 %v1098, %v1108
        %v1110 = vmul.f32 %v1101, %v1108
        %v1111 = vmul.f32 %v1104, %v1108
        %v1112 = vmul.f32 %v1107, %v1108
        %v1113 = vld [vmem:[%s3] sm:$0xff]
        %v1114 = vld [vmem:[%s3 + $0x8] sm:$0xff]
        %v1115 = vld [vmem:[%s4] sm:$0x1]
        %v1117 = vlaneseq
        %v1118 = vshrl.u32 %v1117, 7
        %v1119 = vsub.s32 0, %v1118
        %v1120 = vrot.slane %v1115, %v1119
        %v1126 = vlaneseq
        %v1127 = vand.u32 %v1126, 127
        %v1128 = vlaneseq
        %v1129 = vshrl.u32 %v1128, 7
        %v1130 = vsub.s32 %v1127, %v1129
        %v1131 = vrot.slane %v1109, %v1130
        %v1132 = vadd.s32 %v1127, 4294967288
        %v1133 = vlaneseq
        %v1134 = vshrl.u32 %v1133, 7
        %v1135 = vsub.s32 %v1132, %v1134
        %v1136 = vrot.slane %v1110, %v1135
        %vm1137 = vcmask 130112
        %v1138 = vsel %vm1137, %v1136, %v1131
        %v1139 = vlaneseq
        %v1140 = vshrl.u32 %v1139, 7
        %v1141 = vsub.s32 %v1127, %v1140
        %v1142 = vrot.slane %v1111, %v1141
        %v1143 = vlaneseq
        %v1144 = vshrl.u32 %v1143, 7
        %v1145 = vsub.s32 %v1132, %v1144
        %v1146 = vrot.slane %v1112, %v1145
        %v1147 = vsel %vm1137, %v1146, %v1142
        %vm1148 = vcmask 1041409
        %v1149 = vsel %vm1148, %v1147, %v1138
        %vm1150 = vcmask 130048
        %v1151 = vsel %vm1150, %v1149, 0
        %1153 = vmatprep.subr.mxu0 0.0
        %1154 = vmatpush1.msra.mxu0 %v1113
        %1155 = vmatprep.subr.mxu0 0.0
        %1156 = vmatpush1.msra.mxu0 %v1114
        %1157 = vmatprep.subr.mxu0 0.0
        %1158 = vmatpush1.msra.mxu0 0.0
        %1159 = vmatprep.subr.mxu0 0.0
        %1160 = vmatpush1.msra.mxu0 0.0
        %1161 = vmatprep.subr.mxu0 0.0
        %1162 = vmatpush1.msra.mxu0 0.0
        %1163 = vmatprep.subr.mxu0 0.0
        %1164 = vmatpush1.msra.mxu0 0.0
        %1165 = vmatprep.subr.mxu0 0.0
        %1166 = vmatpush1.msra.mxu0 0.0
        %1167 = vmatprep.subr.mxu0 0.0
        %1168 = vmatpush1.msra.mxu0 0.0
        %1169 = vmatprep.subr.mxu0 0.0
        %1170 = vmatpush1.msra.mxu0 0.0
        %1171 = vmatprep.subr.mxu0 0.0
        %1172 = vmatpush1.msra.mxu0 0.0
        %1173 = vmatprep.subr.mxu0 0.0
        %1174 = vmatpush1.msra.mxu0 0.0
        %1175 = vmatprep.subr.mxu0 0.0
        %1176 = vmatpush1.msra.mxu0 0.0
        %1177 = vmatprep.subr.mxu0 0.0
        %1178 = vmatpush1.msra.mxu0 0.0
        %1179 = vmatprep.subr.mxu0 0.0
        %1180 = vmatpush1.msra.mxu0 0.0
        %1181 = vmatprep.subr.mxu0 0.0
        %1182 = vmatpush1.msra.mxu0 0.0
        %1183 = vmatprep.subr.mxu0 0.0
        %1184 = vmatpush1.msra.mxu0 0.0
        %1185 = vmatprep.subr.mxu0 0.0
        %1186 = vmatpush1.msra.mxu0 0.0
        %1187 = vmatprep.subr.mxu0 0.0
        %1188 = vmatpush1.msra.mxu0 0.0
        %1189 = vmatprep.subr.mxu0 0.0
        %1190 = vmatpush1.msra.mxu0 0.0
        %1191 = vmatprep.subr.mxu0 0.0
        %1192 = vmatpush1.msra.mxu0 0.0
        %1193 = vmatprep.subr.mxu0 0.0
        %1194 = vmatpush1.msra.mxu0 0.0
        %1195 = vmatprep.subr.mxu0 0.0
        %1196 = vmatpush1.msra.mxu0 0.0
        %1197 = vmatprep.subr.mxu0 0.0
        %1198 = vmatpush1.msra.mxu0 0.0
        %1199 = vmatprep.subr.mxu0 0.0
        %1200 = vmatpush1.msra.mxu0 0.0
        %1201 = vmatprep.subr.mxu0 0.0
        %1202 = vmatpush1.msra.mxu0 0.0
        %1203 = vmatprep.subr.mxu0 0.0
        %1204 = vmatpush1.msra.mxu0 0.0
        %1205 = vmatprep.subr.mxu0 0.0
        %1206 = vmatpush1.msra.mxu0 0.0
        %1207 = vmatprep.subr.mxu0 0.0
        %1208 = vmatpush1.msra.mxu0 0.0
        %1209 = vmatprep.subr.mxu0 0.0
        %1210 = vmatpush1.msra.mxu0 0.0
        %1211 = vmatprep.subr.mxu0 0.0
        %1212 = vmatpush1.msra.mxu0 0.0
        %1213 = vmatprep.subr.mxu0 0.0
        %1214 = vmatpush1.msra.mxu0 0.0
        %1215 = vmatprep.subr.mxu0 0.0
        %1216 = vmatpush1.msra.mxu0 0.0
        %1217 = vmatprep.mubr.f32.mxu0 0.0
        %1218 = vmatmul.mubr.f32.gmra.mrb[0].mxu0 %v1151
        %v1219 = vpop.f32.mrb[0].mxu0
        %v1220 = vadd.f32 %v1120, %v1219
        %v1221 = vpop.f32.mrb[0].mxu0
        %1222 = vdwg.mxu0
        %v1223 = vld [vmem:[%s5] sm:$0xff]
        %v1224 = vld [vmem:[%s5 + $0x8] sm:$0xff]
        %v1225 = vld [vmem:[%s5 + $0x10] sm:$0xff]
        %v1226 = vld [vmem:[%s5 + $0x18] sm:$0xff]
        %v1227 = vld [vmem:[%s5 + $0x20] sm:$0xff]
        %v1228 = vld [vmem:[%s5 + $0x28] sm:$0xff]
        %v1229 = vld [vmem:[%s5 + $0x30] sm:$0xff]
        %v1230 = vld [vmem:[%s5 + $0x38] sm:$0xff]
        %v1231 = vld [vmem:[%s6] sm:$0x1]
        %v1233 = vlaneseq
        %v1234 = vshrl.u32 %v1233, 7
        %v1235 = vsub.s32 0, %v1234
        %v1236 = vrot.slane %v1231, %v1235
        %vm1238 = vcmask 523264
        %v1240 = vsel %vm1238, %v1220, 0
        %1242 = vmatprep.subr.mxu0 0.0
        %1243 = vmatpush1.msra.mxu0 %v1223
        %1244 = vmatprep.subr.mxu0 0.0
        %1245 = vmatpush1.msra.mxu0 %v1224
        %1246 = vmatprep.subr.mxu0 0.0
        %1247 = vmatpush1.msra.mxu0 %v1225
        %1248 = vmatprep.subr.mxu0 0.0
        %1249 = vmatpush1.msra.mxu0 %v1226
        %1250 = vmatprep.subr.mxu0 0.0
        %1251 = vmatpush1.msra.mxu0 %v1227
        %1252 = vmatprep.subr.mxu0 0.0
        %1253 = vmatpush1.msra.mxu0 %v1228
        %1254 = vmatprep.subr.mxu0 0.0
        %1255 = vmatpush1.msra.mxu0 %v1229
        %1256 = vmatprep.subr.mxu0 0.0
        %1257 = vmatpush1.msra.mxu0 %v1230
        %1258 = vmatprep.subr.mxu0 0.0
        %1259 = vmatpush1.msra.mxu0 0.0
        %1260 = vmatprep.subr.mxu0 0.0
        %1261 = vmatpush1.msra.mxu0 0.0
        %1262 = vmatprep.subr.mxu0 0.0
        %1263 = vmatpush1.msra.mxu0 0.0
        %1264 = vmatprep.subr.mxu0 0.0
        %1265 = vmatpush1.msra.mxu0 0.0
        %1266 = vmatprep.subr.mxu0 0.0
        %1267 = vmatpush1.msra.mxu0 0.0
        %1268 = vmatprep.subr.mxu0 0.0
        %1269 = vmatpush1.msra.mxu0 0.0
        %1270 = vmatprep.subr.mxu0 0.0
        %1271 = vmatpush1.msra.mxu0 0.0
        %1272 = vmatprep.subr.mxu0 0.0
        %1273 = vmatpush1.msra.mxu0 0.0
        %1274 = vmatprep.subr.mxu0 0.0
        %1275 = vmatpush1.msra.mxu0 0.0
        %1276 = vmatprep.subr.mxu0 0.0
        %1277 = vmatpush1.msra.mxu0 0.0
        %1278 = vmatprep.subr.mxu0 0.0
        %1279 = vmatpush1.msra.mxu0 0.0
        %1280 = vmatprep.subr.mxu0 0.0
        %1281 = vmatpush1.msra.mxu0 0.0
        %1282 = vmatprep.subr.mxu0 0.0
        %1283 = vmatpush1.msra.mxu0 0.0
        %1284 = vmatprep.subr.mxu0 0.0
        %1285 = vmatpush1.msra.mxu0 0.0
        %1286 = vmatprep.subr.mxu0 0.0
        %1287 = vmatpush1.msra.mxu0 0.0
        %1288 = vmatprep.subr.mxu0 0.0
        %1289 = vmatpush1.msra.mxu0 0.0
        %1290 = vmatprep.subr.mxu0 0.0
        %1291 = vmatpush1.msra.mxu0 0.0
        %1292 = vmatprep.subr.mxu0 0.0
        %1293 = vmatpush1.msra.mxu0 0.0
        %1294 = vmatprep.subr.mxu0 0.0
        %1295 = vmatpush1.msra.mxu0 0.0
        %1296 = vmatprep.subr.mxu0 0.0
        %1297 = vmatpush1.msra.mxu0 0.0
        %1298 = vmatprep.subr.mxu0 0.0
        %1299 = vmatpush1.msra.mxu0 0.0
        %1300 = vmatprep.subr.mxu0 0.0
        %1301 = vmatpush1.msra.mxu0 0.0
        %1302 = vmatprep.subr.mxu0 0.0
        %1303 = vmatpush1.msra.mxu0 0.0
        %1304 = vmatprep.subr.mxu0 0.0
        %1305 = vmatpush1.msra.mxu0 0.0
        %1306 = vmatprep.mubr.f32.mxu0 0.0
        %1307 = vmatmul.mubr.f32.gmra.mrb[0].mxu0 %v1240
        %v1308 = vpop.f32.mrb[0].mxu0
        %v1309 = vadd.f32 %v1236, %v1308
        %v1310 = vpop.f32.mrb[0].mxu0
        %1311 = vdwg.mxu0
        %1313 = vrot.lane.b32.xlu0 %v1309, 112
        %v1314 = vpop.permute.xlu0 %1313
        %1316 = vrot.lane.b32.xlu0 %v1309, 96
        %v1317 = vpop.permute.xlu0 %1316
        %1319 = vrot.lane.b32.xlu0 %v1309, 80
        %v1320 = vpop.permute.xlu0 %1319
        %1322 = vrot.lane.b32.xlu0 %v1309, 64
        %v1323 = vpop.permute.xlu0 %1322
        %1325 = vrot.lane.b32.xlu0 %v1309, 48
        %v1326 = vpop.permute.xlu0 %1325
        %1328 = vrot.lane.b32.xlu0 %v1309, 32
        %v1329 = vpop.permute.xlu0 %1328
        %1331 = vrot.lane.b32.xlu0 %v1309, 16
        %v1332 = vpop.permute.xlu0 %1331
        %v1334 = vcombine.low %v1309, %v1317
        %v1336 = vunpack.c.l.s4 1983009808
        %v1337 = vunpack.c.0.s8 %v1336
        %v1338 = vlaneseq
        %v1339 = vshrl.u32 %v1338, 7
        %v1340 = vsub.s32 %v1337, %v1339
        %v1341 = vrot.slane %v1334, %v1340
        %v1342 = vcombine.low %v1314, %v1320
        %v1344 = vunpack.c.l.s4 1983009808
        %v1345 = vunpack.c.0.s8 %v1344
        %v1346 = vlaneseq
        %v1347 = vshrl.u32 %v1346, 7
        %v1348 = vsub.s32 %v1345, %v1347
        %v1349 = vrot.slane %v1342, %v1348
        %v1350 = vcombine.low %v1323, %v1329
        %v1352 = vunpack.c.l.s4 1983009808
        %v1353 = vunpack.c.0.s8 %v1352
        %v1354 = vlaneseq
        %v1355 = vshrl.u32 %v1354, 7
        %v1356 = vsub.s32 %v1353, %v1355
        %v1357 = vrot.slane %v1350, %v1356
        %v1358 = vcombine.low %v1326, %v1332
        %v1360 = vunpack.c.l.s4 1983009808
        %v1361 = vunpack.c.0.s8 %v1360
        %v1362 = vlaneseq
        %v1363 = vshrl.u32 %v1362, 7
        %v1364 = vsub.s32 %v1361, %v1363
        %v1365 = vrot.slane %v1358, %v1364
        %v1366 = vcombine.low %v1341, %v1349
        %v1368 = vunpack.c.l.s4 1934713408
        %v1369 = vunpack.c.0.s8 %v1368
        %v1370 = vlaneseq
        %v1371 = vshrl.u32 %v1370, 7
        %v1372 = vsub.s32 %v1369, %v1371
        %v1373 = vrot.slane %v1366, %v1372
        %v1374 = vcombine.low %v1357, %v1365
        %v1376 = vunpack.c.l.s4 1934713408
        %v1377 = vunpack.c.0.s8 %v1376
        %v1378 = vlaneseq
        %v1379 = vshrl.u32 %v1378, 7
        %v1380 = vsub.s32 %v1377, %v1379
        %v1381 = vrot.slane %v1374, %v1380
        %v1382 = vcombine.low %v1373, %v1381
        %v1383 = vcombine.high %v1373, %v1381
        %v1385 = vsel %vm1150, %v1382, 0
        %1387 = vmatprep.subr.mxu0 0.0
        %1388 = vmatpush1.msra.mxu0 %v1081
        %1389 = vmatprep.subr.mxu0 0.0
        %1390 = vmatpush1.msra.mxu0 %v1084
        %1391 = vmatprep.subr.mxu0 0.0
        %1392 = vmatpush1.msra.mxu0 0.0
        %1393 = vmatprep.subr.mxu0 0.0
        %1394 = vmatpush1.msra.mxu0 0.0
        %1395 = vmatprep.subr.mxu0 0.0
        %1396 = vmatpush1.msra.mxu0 0.0
        %1397 = vmatprep.subr.mxu0 0.0
        %1398 = vmatpush1.msra.mxu0 0.0
        %1399 = vmatprep.subr.mxu0 0.0
        %1400 = vmatpush1.msra.mxu0 0.0
        %1401 = vmatprep.subr.mxu0 0.0
        %1402 = vmatpush1.msra.mxu0 0.0
        %1403 = vmatprep.subr.mxu0 0.0
        %1404 = vmatpush1.msra.mxu0 0.0
        %1405 = vmatprep.subr.mxu0 0.0
        %1406 = vmatpush1.msra.mxu0 0.0
        %1407 = vmatprep.subr.mxu0 0.0
        %1408 = vmatpush1.msra.mxu0 0.0
        %1409 = vmatprep.subr.mxu0 0.0
        %1410 = vmatpush1.msra.mxu0 0.0
        %1411 = vmatprep.subr.mxu0 0.0
        %1412 = vmatpush1.msra.mxu0 0.0
        %1413 = vmatprep.subr.mxu0 0.0
        %1414 = vmatpush1.msra.mxu0 0.0
        %1415 = vmatprep.subr.mxu0 0.0
        %1416 = vmatpush1.msra.mxu0 0.0
        %1417 = vmatprep.subr.mxu0 0.0
        %1418 = vmatpush1.msra.mxu0 0.0
        %1419 = vmatprep.subr.mxu0 0.0
        %1420 = vmatpush1.msra.mxu0 0.0
        %1421 = vmatprep.subr.mxu0 0.0
        %1422 = vmatpush1.msra.mxu0 0.0
        %1423 = vmatprep.subr.mxu0 0.0
        %1424 = vmatpush1.msra.mxu0 0.0
        %1425 = vmatprep.subr.mxu0 0.0
        %1426 = vmatpush1.msra.mxu0 0.0
        %1427 = vmatprep.subr.mxu0 0.0
        %1428 = vmatpush1.msra.mxu0 0.0
        %1429 = vmatprep.subr.mxu0 0.0
        %1430 = vmatpush1.msra.mxu0 0.0
        %1431 = vmatprep.subr.mxu0 0.0
        %1432 = vmatpush1.msra.mxu0 0.0
        %1433 = vmatprep.subr.mxu0 0.0
        %1434 = vmatpush1.msra.mxu0 0.0
        %1435 = vmatprep.subr.mxu0 0.0
        %1436 = vmatpush1.msra.mxu0 0.0
        %1437 = vmatprep.subr.mxu0 0.0
        %1438 = vmatpush1.msra.mxu0 0.0
        %1439 = vmatprep.subr.mxu0 0.0
        %1440 = vmatpush1.msra.mxu0 0.0
        %1441 = vmatprep.subr.mxu0 0.0
        %1442 = vmatpush1.msra.mxu0 0.0
        %1443 = vmatprep.subr.mxu0 0.0
        %1444 = vmatpush1.msra.mxu0 0.0
        %1445 = vmatprep.subr.mxu0 0.0
        %1446 = vmatpush1.msra.mxu0 0.0
        %1447 = vmatprep.subr.mxu0 0.0
        %1448 = vmatpush1.msra.mxu0 0.0
        %1449 = vmatprep.subr.mxu0 0.0
        %1450 = vmatpush1.msra.mxu0 0.0
        %1451 = vmatprep.mubr.f32.mxu0 0.0
        %1452 = vmatmul.mubr.f32.gmra.mrb[0].mxu0 %v1385
        %v1453 = vpop.f32.mrb[0].mxu0
        %v1454 = vadd.f32 0.0, %v1453
        %v1455 = vpop.f32.mrb[0].mxu0
        %1456 = vdwg.mxu0
        %v1458 = vsel %vm1150, %v1383, 0
        %1460 = vmatprep.subr.mxu0 0.0
        %1461 = vmatpush1.msra.mxu0 %v1089
        %1462 = vmatprep.subr.mxu0 0.0
        %1463 = vmatpush1.msra.mxu0 %v1092
        %1464 = vmatprep.subr.mxu0 0.0
        %1465 = vmatpush1.msra.mxu0 0.0
        %1466 = vmatprep.subr.mxu0 0.0
        %1467 = vmatpush1.msra.mxu0 0.0
        %1468 = vmatprep.subr.mxu0 0.0
        %1469 = vmatpush1.msra.mxu0 0.0
        %1470 = vmatprep.subr.mxu0 0.0
        %1471 = vmatpush1.msra.mxu0 0.0
        %1472 = vmatprep.subr.mxu0 0.0
        %1473 = vmatpush1.msra.mxu0 0.0
        %1474 = vmatprep.subr.mxu0 0.0
        %1475 = vmatpush1.msra.mxu0 0.0
        %1476 = vmatprep.subr.mxu0 0.0
        %1477 = vmatpush1.msra.mxu0 0.0
        %1478 = vmatprep.subr.mxu0 0.0
        %1479 = vmatpush1.msra.mxu0 0.0
        %1480 = vmatprep.subr.mxu0 0.0
        %1481 = vmatpush1.msra.mxu0 0.0
        %1482 = vmatprep.subr.mxu0 0.0
        %1483 = vmatpush1.msra.mxu0 0.0
        %1484 = vmatprep.subr.mxu0 0.0
        %1485 = vmatpush1.msra.mxu0 0.0
        %1486 = vmatprep.subr.mxu0 0.0
        %1487 = vmatpush1.msra.mxu0 0.0
        %1488 = vmatprep.subr.mxu0 0.0
        %1489 = vmatpush1.msra.mxu0 0.0
        %1490 = vmatprep.subr.mxu0 0.0
        %1491 = vmatpush1.msra.mxu0 0.0
        %1492 = vmatprep.subr.mxu0 0.0
        %1493 = vmatpush1.msra.mxu0 0.0
        %1494 = vmatprep.subr.mxu0 0.0
        %1495 = vmatpush1.msra.mxu0 0.0
        %1496 = vmatprep.subr.mxu0 0.0
        %1497 = vmatpush1.msra.mxu0 0.0
        %1498 = vmatprep.subr.mxu0 0.0
        %1499 = vmatpush1.msra.mxu0 0.0
        %1500 = vmatprep.subr.mxu0 0.0
        %1501 = vmatpush1.msra.mxu0 0.0
        %1502 = vmatprep.subr.mxu0 0.0
        %1503 = vmatpush1.msra.mxu0 0.0
        %1504 = vmatprep.subr.mxu0 0.0
        %1505 = vmatpush1.msra.mxu0 0.0
        %1506 = vmatprep.subr.mxu0 0.0
        %1507 = vmatpush1.msra.mxu0 0.0
        %1508 = vmatprep.subr.mxu0 0.0
        %1509 = vmatpush1.msra.mxu0 0.0
        %1510 = vmatprep.subr.mxu0 0.0
        %1511 = vmatpush1.msra.mxu0 0.0
        %1512 = vmatprep.subr.mxu0 0.0
        %1513 = vmatpush1.msra.mxu0 0.0
        %1514 = vmatprep.subr.mxu0 0.0
        %1515 = vmatpush1.msra.mxu0 0.0
        %1516 = vmatprep.subr.mxu0 0.0
        %1517 = vmatpush1.msra.mxu0 0.0
        %1518 = vmatprep.subr.mxu0 0.0
        %1519 = vmatpush1.msra.mxu0 0.0
        %1520 = vmatprep.subr.mxu0 0.0
        %1521 = vmatpush1.msra.mxu0 0.0
        %1522 = vmatprep.subr.mxu0 0.0
        %1523 = vmatpush1.msra.mxu0 0.0
        %1524 = vmatprep.mubr.f32.mxu0 0.0
        %1525 = vmatmul.mubr.f32.gmra.mrb[0].mxu0 %v1458
        %v1526 = vpop.f32.mrb[0].mxu0
        %v1527 = vadd.f32 0.0, %v1526
        %v1528 = vpop.f32.mrb[0].mxu0
        %1529 = vdwg.mxu0
        %v1530 = vcombine.high %v1454, 0.0
        %v1532 = vunpack.c.l.s4 1983009808
        %v1533 = vunpack.c.0.s8 %v1532
        %v1534 = vlaneseq
        %v1535 = vshrl.u32 %v1534, 7
        %v1536 = vsub.s32 %v1533, %v1535
        %v1537 = vrot.slane %v1454, %v1536
        %v1539 = vunpack.c.l.s4 1983009808
        %v1540 = vunpack.c.0.s8 %v1539
        %v1541 = vlaneseq
        %v1542 = vshrl.u32 %v1541, 7
        %v1543 = vsub.s32 %v1540, %v1542
        %v1544 = vrot.slane %v1530, %v1543
        %v1545 = vcombine.high %v1537, 0.0
        %v1547 = vunpack.c.l.s4 1934713408
        %v1548 = vunpack.c.0.s8 %v1547
        %v1549 = vlaneseq
        %v1550 = vshrl.u32 %v1549, 7
        %v1551 = vsub.s32 %v1548, %v1550
        %v1552 = vrot.slane %v1537, %v1551
        %v1554 = vunpack.c.l.s4 1934713408
        %v1555 = vunpack.c.0.s8 %v1554
        %v1556 = vlaneseq
        %v1557 = vshrl.u32 %v1556, 7
        %v1558 = vsub.s32 %v1555, %v1557
        %v1559 = vrot.slane %v1545, %v1558
        %v1560 = vcombine.high %v1544, 0.0
        %v1562 = vunpack.c.l.s4 1934713408
        %v1563 = vunpack.c.0.s8 %v1562
        %v1564 = vlaneseq
        %v1565 = vshrl.u32 %v1564, 7
        %v1566 = vsub.s32 %v1563, %v1565
        %v1567 = vrot.slane %v1544, %v1566
        %v1569 = vunpack.c.l.s4 1934713408
        %v1570 = vunpack.c.0.s8 %v1569
        %v1571 = vlaneseq
        %v1572 = vshrl.u32 %v1571, 7
        %v1573 = vsub.s32 %v1570, %v1572
        %v1574 = vrot.slane %v1560, %v1573
        %v1575 = vcombine.high %v1552, 0.0
        %v1576 = vcombine.high %v1559, 0.0
        %v1577 = vcombine.high %v1567, 0.0
        %v1578 = vcombine.high %v1574, 0.0
        %v1579 = vcombine.high %v1527, 0.0
        %v1581 = vunpack.c.l.s4 1983009808
        %v1582 = vunpack.c.0.s8 %v1581
        %v1583 = vlaneseq
        %v1584 = vshrl.u32 %v1583, 7
        %v1585 = vsub.s32 %v1582, %v1584
        %v1586 = vrot.slane %v1527, %v1585
        %v1588 = vunpack.c.l.s4 1983009808
        %v1589 = vunpack.c.0.s8 %v1588
        %v1590 = vlaneseq
        %v1591 = vshrl.u32 %v1590, 7
        %v1592 = vsub.s32 %v1589, %v1591
        %v1593 = vrot.slane %v1579, %v1592
        %v1594 = vcombine.high %v1586, 0.0
        %v1596 = vunpack.c.l.s4 1934713408
        %v1597 = vunpack.c.0.s8 %v1596
        %v1598 = vlaneseq
        %v1599 = vshrl.u32 %v1598, 7
        %v1600 = vsub.s32 %v1597, %v1599
        %v1601 = vrot.slane %v1586, %v1600
        %v1603 = vunpack.c.l.s4 1934713408
        %v1604 = vunpack.c.0.s8 %v1603
        %v1605 = vlaneseq
        %v1606 = vshrl.u32 %v1605, 7
        %v1607 = vsub.s32 %v1604, %v1606
        %v1608 = vrot.slane %v1594, %v1607
        %v1609 = vcombine.high %v1593, 0.0
        %v1611 = vunpack.c.l.s4 1934713408
        %v1612 = vunpack.c.0.s8 %v1611
        %v1613 = vlaneseq
        %v1614 = vshrl.u32 %v1613, 7
        %v1615 = vsub.s32 %v1612, %v1614
        %v1616 = vrot.slane %v1593, %v1615
        %v1618 = vunpack.c.l.s4 1934713408
        %v1619 = vunpack.c.0.s8 %v1618
        %v1620 = vlaneseq
        %v1621 = vshrl.u32 %v1620, 7
        %v1622 = vsub.s32 %v1619, %v1621
        %v1623 = vrot.slane %v1609, %v1622
        %v1624 = vcombine.high %v1601, 0.0
        %v1625 = vcombine.high %v1608, 0.0
        %v1626 = vcombine.high %v1616, 0.0
        %v1627 = vcombine.high %v1623, 0.0
        %1630 = vrot.lane.b32.xlu0 %v1575, 32
        %v1631 = vpop.permute.xlu0 %1630
        %1632 = vrot.lane.b32.xlu0 %v1624, 32
        %v1633 = vpop.permute.xlu0 %1632
        %1638 = vrot.lane.b32.xlu0 %v1559, 64
        %v1639 = vpop.permute.xlu0 %1638
        %1640 = vrot.lane.b32.xlu0 %v1608, 64
        %v1641 = vpop.permute.xlu0 %1640
        %1646 = vrot.lane.b32.xlu0 %v1576, 96
        %v1647 = vpop.permute.xlu0 %1646
        %1648 = vrot.lane.b32.xlu0 %v1625, 96
        %v1649 = vpop.permute.xlu0 %1648
        %1654 = vrot.lane.b32.xlu0 %v1577, 32
        %v1655 = vpop.permute.xlu0 %1654
        %1656 = vrot.lane.b32.xlu0 %v1626, 32
        %v1657 = vpop.permute.xlu0 %1656
        %1662 = vrot.lane.b32.xlu0 %v1574, 64
        %v1663 = vpop.permute.xlu0 %1662
        %1664 = vrot.lane.b32.xlu0 %v1623, 64
        %v1665 = vpop.permute.xlu0 %1664
        %1670 = vrot.lane.b32.xlu0 %v1578, 96
        %v1671 = vpop.permute.xlu0 %1670
        %1672 = vrot.lane.b32.xlu0 %v1627, 96
        %v1673 = vpop.permute.xlu0 %1672
        %v1676 = vsel %vm1095, %v1552, %v1631
        %v1677 = vsel %vm1095, %v1601, %v1633
        %v1678 = vsel %vm1238, %v1676, %v1639
        %v1679 = vsel %vm1238, %v1677, %v1641
        %vm1680 = vcmask 785408
        %v1681 = vsel %vm1680, %v1678, %v1647
        %v1682 = vsel %vm1680, %v1679, %v1649
        %v1683 = vsel %vm1095, %v1567, %v1655
        %v1684 = vsel %vm1095, %v1616, %v1657
        %v1685 = vsel %vm1238, %v1683, %v1663
        %v1686 = vsel %vm1238, %v1684, %v1665
        %v1687 = vsel %vm1680, %v1685, %v1671
        %v1688 = vsel %vm1680, %v1686, %v1673
        %v1693 = vcombine.low %v1681, %v1687
        %v1695 = vunpack.c.l.s4 1966171168
        %v1696 = vunpack.c.0.s8 %v1695
        %v1697 = vlaneseq
        %v1698 = vshrl.u32 %v1697, 7
        %v1699 = vsub.s32 %v1696, %v1698
        %v1700 = vrot.slane %v1693, %v1699
        %v1702 = vunpack.c.l.s4 1966171168
        %v1703 = vunpack.c.0.s8 %v1702
        %v1704 = vlaneseq
        %v1705 = vshrl.u32 %v1704, 7
        %v1706 = vsub.s32 %v1703, %v1705
        %v1707 = vrot.slane %v1700, %v1706
        %v1708 = vcombine.low %v1682, %v1688
        %v1710 = vunpack.c.l.s4 1966171168
        %v1711 = vunpack.c.0.s8 %v1710
        %v1712 = vlaneseq
        %v1713 = vshrl.u32 %v1712, 7
        %v1714 = vsub.s32 %v1711, %v1713
        %v1715 = vrot.slane %v1708, %v1714
        %v1717 = vunpack.c.l.s4 1966171168
        %v1718 = vunpack.c.0.s8 %v1717
        %v1719 = vlaneseq
        %v1720 = vshrl.u32 %v1719, 7
        %v1721 = vsub.s32 %v1718, %v1720
        %v1722 = vrot.slane %v1715, %v1721
        %v1725 = vlaneseq
        %vm1726 = vcmp.ge.s32.totalorder %v1725, 0
        %vm1727 = vcmp.lt.s32.totalorder %v1725, 256
        %vm1728 = vmand %vm1726, %vm1727
        %1729 = vst.msk [vmem:[%s274] sm:$0x3] %vm1728, %v1707
        %1730 = vst.msk [vmem:[%s274 + $0x2] sm:$0x3] %vm1728, %v1722
        %s1731 = sand.u32 %s181, 1
        %s1732 = scalar_lea.sflag [#allocation3], %s1731
        %s1733 = sand.u32 %s181, 1
        %s1734 = smul.addr %s1733, 4
        %s1735 = scalar_lea.vmem [#allocation2], %s1734
        // Predicated region
        $region49: #{tpu_custom_call.1} parent=47 // pred_check
          %p1736 = pneg %p191
        $region50: #{tpu_custom_call.1} parent=47 // pred_check_branch
          %1738 = sbr.rel (%p1736) target = $region52
        $region51: #{tpu_custom_call.1} parent=47 // pred_region
          %s1739 = smul.u32 2, %s21
          %s1741 = ssub.s32 64, 64
          %1742 = vsyncadd %s1732, %s1741
          %s1743 = smul.addr %s1739, 2
          %s1744 = smul.addr %s1743, 16
          %s1745 = scalar_lea.hbm %s7, %s1744
          %s1746 = sshll.u32 %s1735, 4
          %s1747 = int_to_ptr.vmem [resolvable:$true] %s1746
          %1752 = dma.vmem_to_hbm [thread:$0]  %s1747, 64, %s1745, %s1732, 32, 32, 2
        $region52: #{tpu_custom_call.1} parent=47 // pred_fallthru
          _
      $region48: #{tpu_custom_call.1} parent=5 // pred_fallthru
        _
      %p1753 = scmp.le.s32.totalorder 2, %s16
      // Predicated region
      $region53: #{tpu_custom_call.1} parent=5 // pred_check
        %p1754 = pneg %p1753
      $region54: #{tpu_custom_call.1} parent=5 // pred_check_branch
        %1756 = sbr.rel (%p1754) target = $region56
      $region55: #{tpu_custom_call.1} parent=5 // pred_region
        %s1757 = ssub.s32 %s16, 2
        // Predicated region
        $region57: #{tpu_custom_call.1} parent=55 // pred_check
          %p1758 = pneg %p197
        $region58: #{tpu_custom_call.1} parent=55 // pred_check_branch
          %1760 = sbr.rel (%p1758) target = $region60
        $region59: #{tpu_custom_call.1} parent=55 // pred_region
          %s1761 = sand.u32 %s182, 1
          %s1762 = scalar_lea.sflag [#allocation3], %s1761
          %s1763 = sand.u32 %s182, 1
          %s1764 = smul.addr %s1763, 4
          %s1765 = scalar_lea.vmem [#allocation2], %s1764
          %1766 = dma.done %s1762, 64
        $region60: #{tpu_custom_call.1} parent=55 // pred_fallthru
          _
      $region56: #{tpu_custom_call.1} parent=5 // pred_fallthru
        _
    $region6: #{tpu_custom_call.1} parent=1 // loop_footer
      %s20 = sadd.s32 1, %s16
    $region7: #{tpu_custom_call.1} parent=1 // loop_footer_branch
      %15 = sbr.rel target = $region3
    $region8: #{tpu_custom_call.1} parent=1 // loop_exit
      _
    %1767 = vsyncpa [#allocation3], 1
    %s1768 = scalar_lea.sflag [#allocation3], 1
    %1769 = vsyncpa %s1768, 1

</llo_original>
